<compile_context>
chip_gen: v7x
topology: tpu7x:2x2x1
jax: 0.10.0
libtpu: 0.0.40
codegen_flags: <defaults>
</compile_context>

<pallas_src>
import functools

import jax
import jax.numpy as jnp
from jax.experimental import pallas as pl
from jax.experimental.pallas import tpu as pltpu

FEATURES_SIZE = 100      # logical feature width
FEATURES_PAD = 128       # lane-padded feature width
NUM_ACTIONS = 4
GOAL_SIZE = 2
CAT_HIDDEN = 256


def _usf_kernel(
    # batch-tiled inputs
    agent_pos_ref,            # (TB, 2) int32
    policy_goal_ref,          # (TB, 2) f32
    env_goal_ref,             # (TB, 2) f32
    # VMEM-resident weights (feature axis zero-padded 100 -> 128)
    pg_w1_ref, pg_b1_ref,     # (2,64), (1,64)
    pg_w2_ref, pg_b2_ref,     # (64,128), (1,128)
    eg_w1_ref, eg_b1_ref,     # (2,64), (1,64)
    eg_w2_ref, eg_b2_ref,     # (64,64), (1,64)
    eg_w3_ref, eg_b3_ref,     # (64,128), (1,128)
    cat_w1_ref,               # (256,256) fused [feat_pad rows ; goal_pad rows]
    cat_b1_ref,               # (1,256)
    cat_w2_ref, cat_b2_ref,   # (256, A*128), (1, A*128)  per-action, lane-aligned
    # batch-tiled outputs
    q_ref,                    # (TB, 128)     q in lanes [0, A); lanes A..127 garbage
    sf_ref,                   # (TB, A*128)
    egw_ref,                  # (TB, 128)
    # VMEM scratch
    concat_ref,               # (TB, 2*128) f32
    h2_ref,                   # (TB, 256)   f32
    *,
    num_actions: int,
    feat_pad: int,
):
    TB = agent_pos_ref.shape[0]
    FP = feat_pad
    A = num_actions

    lane = jax.lax.broadcasted_iota(jnp.int32, (TB, FP), 1)

    # ---- positions_to_feature: one-hot of pos[:,0]*9 + pos[:,1] ----
    pos = agent_pos_ref[...].astype(jnp.int32)                      # (TB, 2)
    idx = pos[:, 0:1] * 9 + pos[:, 1:2]                             # (TB, 1)
    features = (lane == idx).astype(jnp.float32)                    # (TB, FP)

    # ---- policy_goal_layer: Linear(2,64) (VPU FMA) -> ReLU -> Linear(64,FP) ----
    pg = policy_goal_ref[...]
    w1 = pg_w1_ref[...]
    h = jnp.maximum(
        pg[:, 0:1] * w1[0:1, :] + pg[:, 1:2] * w1[1:2, :] + pg_b1_ref[...], 0.0
    )                                                               # (TB, 64)
    goal_feat = (
        jnp.dot(h, pg_w2_ref[...], preferred_element_type=jnp.float32) + pg_b2_ref[...]
    )                                                               # (TB, FP)

    # ---- env_goal_layer: Linear(2,64)(FMA) -> ReLU -> Linear(64,64) -> ReLU -> Linear(64,FP)
    eg = env_goal_ref[...]
    ew1 = eg_w1_ref[...]
    e1 = jnp.maximum(
        eg[:, 0:1] * ew1[0:1, :] + eg[:, 1:2] * ew1[1:2, :] + eg_b1_ref[...], 0.0
    )
    e2 = jnp.maximum(
        jnp.dot(e1, eg_w2_ref[...], preferred_element_type=jnp.float32) + eg_b2_ref[...],
        0.0,
    )
    egw_ref[...] = (
        jnp.dot(e2, eg_w3_ref[...], preferred_element_type=jnp.float32) + eg_b3_ref[...]
    )                                                               # (TB, FP)

    # ---- concatenation_layer hidden: one fused K=256 matmul on the concat slab ----
    concat_ref[:, :FP] = features                                   # lane-dense store
    concat_ref[:, FP:] = goal_feat                                  # lane-dense store
    h2_ref[...] = jnp.maximum(
        jnp.dot(concat_ref[...], cat_w1_ref[...], preferred_element_type=jnp.float32)
        + cat_b1_ref[...],
        0.0,
    )                                                               # (TB, 256)

    # ---- fused sf matmul: (TB,256) @ (256, A*128), single lane-dense store ----
    sf_ref[...] = (
        jnp.dot(h2_ref[...], cat_w2_ref[...], preferred_element_type=jnp.float32)
        + cat_b2_ref[...]
    )

    # ---- per-action q reduction on static 128-aligned slices of sf ----
    # q_ref lanes [A, 128) are intentionally left uninitialized; wrapper slices [:, :A].
    for a in range(A):
        q_ref[:, a:a + 1] = jnp.sum(
            sf_ref[:, a * FP:(a + 1) * FP] * egw_ref[...], axis=1, keepdims=True
        )


# ----------------------------- parameters ------------------------------------

def _linear_params(key, fan_in, fan_out):
    # Deterministic init mimicking torch.nn.Linear default (uniform +/- 1/sqrt(fan_in)).
    kw, kb = jax.random.split(key)
    bound = 1.0 / jnp.sqrt(fan_in)
    w = jax.random.uniform(kw, (fan_in, fan_out), jnp.float32, -bound, bound)
    b = jax.random.uniform(kb, (1, fan_out), jnp.float32, -bound, bound)
    return w, b


def init_params(key, features_size=FEATURES_SIZE, num_actions=NUM_ACTIONS,
                goal_size=GOAL_SIZE):
    keys = jax.random.split(key, 7)
    pg_w1, pg_b1 = _linear_params(keys[0], goal_size, 64)
    pg_w2, pg_b2 = _linear_params(keys[1], 64, features_size)
    eg_w1, eg_b1 = _linear_params(keys[2], goal_size, 64)
    eg_w2, eg_b2 = _linear_params(keys[3], 64, 64)
    eg_w3, eg_b3 = _linear_params(keys[4], 64, features_size)
    cat_w1, cat_b1 = _linear_params(keys[5], 2 * features_size, CAT_HIDDEN)
    cat_w2, cat_b2 = _linear_params(keys[6], CAT_HIDDEN, num_actions * features_size)
    return dict(
        pg_w1=pg_w1, pg_b1=pg_b1, pg_w2=pg_w2, pg_b2=pg_b2,
        eg_w1=eg_w1, eg_b1=eg_b1, eg_w2=eg_w2, eg_b2=eg_b2,
        eg_w3=eg_w3, eg_b3=eg_b3,
        cat_w1=cat_w1, cat_b1=cat_b1, cat_w2=cat_w2, cat_b2=cat_b2,
    )


def prepare_params(params, features_size=FEATURES_SIZE, num_actions=NUM_ACTIONS,
                   feat_pad=FEATURES_PAD):
    """One-time layout prep (hoisted out of the per-call path):
      * feature axis zero-padded 100 -> 128 on pg_w2/b2, eg_w3/b3,
      * cat_w1 fused into a single (2*FP, 256) matrix whose rows match the
        in-kernel [features | goal_feat] concat-slab layout (pad rows zero),
      * cat_w2/cat_b2 reorganized so each action's block is 128-lane aligned.
    """
    F, A, FP = features_size, num_actions, feat_pad
    padF = FP - F

    def pad_cols(x):
        return jnp.pad(x, ((0, 0), (0, padF)))

    cat_w1f = jnp.pad(params["cat_w1"][:F, :], ((0, padF), (0, 0)))   # (FP, 256)
    cat_w1g = jnp.pad(params["cat_w1"][F:, :], ((0, padF), (0, 0)))   # (FP, 256)
    cat_w1 = jnp.concatenate([cat_w1f, cat_w1g], axis=0)              # (2*FP, 256)

    cat_w2 = params["cat_w2"].reshape(-1, A, F)
    cat_w2 = jnp.pad(cat_w2, ((0, 0), (0, 0), (0, padF))).reshape(-1, A * FP)
    cat_b2 = params["cat_b2"].reshape(1, A, F)
    cat_b2 = jnp.pad(cat_b2, ((0, 0), (0, 0), (0, padF))).reshape(1, A * FP)

    return dict(
        pg_w1=params["pg_w1"], pg_b1=params["pg_b1"],
        pg_w2=pad_cols(params["pg_w2"]), pg_b2=pad_cols(params["pg_b2"]),
        eg_w1=params["eg_w1"], eg_b1=params["eg_b1"],
        eg_w2=params["eg_w2"], eg_b2=params["eg_b2"],
        eg_w3=pad_cols(params["eg_w3"]), eg_b3=pad_cols(params["eg_b3"]),
        cat_w1=cat_w1, cat_b1=params["cat_b1"],
        cat_w2=cat_w2, cat_b2=cat_b2,
    )


# ------------------------------- forward -------------------------------------

def _round_up(x, m):
    return (x + m - 1) // m * m


def _choose_batch_tile(B):
    """Batch tile: big enough to amortize the ~0.35us/step grid overhead, small
    enough that double-buffered tiles + resident weights stay well under scoped
    VMEM on all generations, and >= 2 grid steps for medium/large batches so
    v7x megacore can shard the (parallel) batch axis."""
    B8 = _round_up(B, 8)
    if B8 <= 64:
        return B8
    if B8 <= 1024:
        return _round_up((B8 + 1) // 2, 8)
    return 512


@functools.partial(
    jax.jit,
    static_argnames=("features_size", "num_actions", "feat_pad", "batch_tile"),
)
def state_goal_usf_forward(agent_position, policy_goal_position, env_goal_position,
                           prepared_params, features_size=FEATURES_SIZE,
                           num_actions=NUM_ACTIONS, feat_pad=FEATURES_PAD,
                           batch_tile=None):
    B = agent_position.shape[0]
    F, A, FP = features_size, num_actions, feat_pad
    H2 = prepared_params["cat_b1"].shape[1]

    if batch_tile is None:
        TB = _choose_batch_tile(B)
    else:
        TB = _round_up(int(batch_tile), 8)   # enforce sublane granularity
    Bp = _round_up(B, TB)

    def pad_batch(x):
        return jnp.pad(x, ((0, Bp - B), (0, 0)))

    agent = pad_batch(agent_position.astype(jnp.int32))
    pgoal = pad_batch(policy_goal_position.astype(jnp.float32))
    egoal = pad_batch(env_goal_position.astype(jnp.float32))

    p = prepared_params
    weights = (
        p["pg_w1"], p["pg_b1"], p["pg_w2"], p["pg_b2"],
        p["eg_w1"], p["eg_b1"], p["eg_w2"], p["eg_b2"], p["eg_w3"], p["eg_b3"],
        p["cat_w1"], p["cat_b1"], p["cat_w2"], p["cat_b2"],
    )

    batch_in_spec = pl.BlockSpec((TB, 2), lambda i: (i, 0))

    def w_spec(arr):
        # Weights are grid-invariant: constant index_map keeps them VMEM-resident.
        return pl.BlockSpec(arr.shape, lambda i: (0, 0))

    kernel = functools.partial(_usf_kernel, num_actions=A, feat_pad=FP)

    q_pad, sf_flat, egw_pad = pl.pallas_call(
        kernel,
        grid=(Bp // TB,),
        out_shape=(
            jax.ShapeDtypeStruct((Bp, FP), jnp.float32),       # q (lane-padded)
            jax.ShapeDtypeStruct((Bp, A * FP), jnp.float32),   # sf (lane-padded, flat)
            jax.ShapeDtypeStruct((Bp, FP), jnp.float32),       # env_goal_weights
        ),
        in_specs=[batch_in_spec, batch_in_spec, batch_in_spec]
        + [w_spec(w) for w in weights],
        out_specs=(
            pl.BlockSpec((TB, FP), lambda i: (i, 0)),
            pl.BlockSpec((TB, A * FP), lambda i: (i, 0)),
            pl.BlockSpec((TB, FP), lambda i: (i, 0)),
        ),
        scratch_shapes=[
            pltpu.VMEM((TB, 2 * FP), jnp.float32),   # [features | goal_feat] slab
            pltpu.VMEM((TB, H2), jnp.float32),       # hidden activations
        ],
        compiler_params=pltpu.CompilerParams(dimension_semantics=("parallel",)),
    )(agent, pgoal, egoal, *weights)

    # Slice lane/batch padding back off to the logical shapes.
    q = q_pad[:B, :A]
    sf = sf_flat[:B].reshape(B, A, FP)[:, :, :F]
    egw = egw_pad[:B, :F]

    # features recomputed in the wrapper (cheap one-hot) instead of being an
    # extra kernel output stream -> less HBM write traffic from the kernel.
    pos = agent_position.astype(jnp.int32)
    idx = pos[:, 0] * 9 + pos[:, 1]
    feat = jax.nn.one_hot(idx, F, dtype=jnp.float32)
    return q, sf, egw, feat


# ------------------------------ reference ------------------------------------

def _reference_forward(agent_position, policy_goal_position, env_goal_position, params):
    F, A = FEATURES_SIZE, NUM_ACTIONS
    pos = agent_position.astype(jnp.int32)
    idx = pos[:, 0] * 9 + pos[:, 1]
    features = jax.nn.one_hot(idx, F, dtype=jnp.float32)

    relu = jax.nn.relu
    h = relu(policy_goal_position @ params["pg_w1"] + params["pg_b1"])
    goal_feat = h @ params["pg_w2"] + params["pg_b2"]

    joined = jnp.concatenate([features, goal_feat], axis=1)
    h2 = relu(joined @ params["cat_w1"] + params["cat_b1"])
    sf = (h2 @ params["cat_w2"] + params["cat_b2"]).reshape(-1, A, F)

    e1 = relu(env_goal_position @ params["eg_w1"] + params["eg_b1"])
    e2 = relu(e1 @ params["eg_w2"] + params["eg_b2"])
    egw = e2 @ params["eg_w3"] + params["eg_b3"]

    q = jnp.sum(sf * egw[:, None, :], axis=2)
    return q, sf, egw, features


if __name__ == "__main__":
    key = jax.random.PRNGKey(0)
    kp, ka, kpg, keg = jax.random.split(key, 4)

    B = 8
    params = init_params(kp)
    prepared = prepare_params(params)   # one-time layout prep (not in per-call path)

    # agent positions on a 9x9-ish grid so pos[0]*9 + pos[1] < 100
    agent_position = jax.random.randint(ka, (B, 2), 0, 9, dtype=jnp.int32)
    policy_goal_position = jax.random.uniform(kpg, (B, GOAL_SIZE), jnp.float32, 0.0, 8.0)
    env_goal_position = jax.random.uniform(keg, (B, GOAL_SIZE), jnp.float32, 0.0, 8.0)

    q, sf, egw, feat = state_goal_usf_forward(
        agent_position, policy_goal_position, env_goal_position, prepared
    )
    jax.block_until_ready((q, sf, egw, feat))

    q_r, sf_r, egw_r, feat_r = _reference_forward(
        agent_position, policy_goal_position, env_goal_position, params
    )
    assert q.shape == (B, NUM_ACTIONS)
    assert sf.shape == (B, NUM_ACTIONS, FEATURES_SIZE)
    assert egw.shape == (B, FEATURES_SIZE)
    assert feat.shape == (B, FEATURES_SIZE)
    assert jnp.allclose(q, q_r, atol=1e-4, rtol=1e-4)
    assert jnp.allclose(sf, sf_r, atol=1e-4, rtol=1e-4)
    assert jnp.allclose(egw, egw_r, atol=1e-4, rtol=1e-4)
    assert jnp.allclose(feat, feat_r)

    print("KERNEL_OK")
</pallas_src>

<mosaic_0001>
module attributes {stable_mosaic.version = 11 : i64} {
  func.func @_usf_kernel(%arg0: i32, %arg1: memref<8x2xi32, #tpu.memory_space<vmem>>, %arg2: memref<8x2xf32, #tpu.memory_space<vmem>>, %arg3: memref<8x2xf32, #tpu.memory_space<vmem>>, %arg4: memref<2x64xf32, #tpu.memory_space<vmem>>, %arg5: memref<1x64xf32, #tpu.memory_space<vmem>>, %arg6: memref<64x128xf32, #tpu.memory_space<vmem>>, %arg7: memref<1x128xf32, #tpu.memory_space<vmem>>, %arg8: memref<2x64xf32, #tpu.memory_space<vmem>>, %arg9: memref<1x64xf32, #tpu.memory_space<vmem>>, %arg10: memref<64x64xf32, #tpu.memory_space<vmem>>, %arg11: memref<1x64xf32, #tpu.memory_space<vmem>>, %arg12: memref<64x128xf32, #tpu.memory_space<vmem>>, %arg13: memref<1x128xf32, #tpu.memory_space<vmem>>, %arg14: memref<256x256xf32, #tpu.memory_space<vmem>>, %arg15: memref<1x256xf32, #tpu.memory_space<vmem>>, %arg16: memref<256x512xf32, #tpu.memory_space<vmem>>, %arg17: memref<1x512xf32, #tpu.memory_space<vmem>>, %arg18: memref<8x128xf32, #tpu.memory_space<vmem>>, %arg19: memref<8x512xf32, #tpu.memory_space<vmem>>, %arg20: memref<8x128xf32, #tpu.memory_space<vmem>>, %arg21: memref<8x256xf32, #tpu.memory_space<vmem>>, %arg22: memref<8x256xf32, #tpu.memory_space<vmem>>) attributes {dimension_semantics = [#tpu.dimension_semantics<parallel>], iteration_bounds = array<i64: 1>, scalar_prefetch = 0 : i64, scratch_operands = 2 : i64, tpu.core_type = #tpu.core_type<tc>, window_params = [{transform_indices = @transform_0, window_bounds = array<i64: 8, 2>}, {transform_indices = @transform_1, window_bounds = array<i64: 8, 2>}, {transform_indices = @transform_2, window_bounds = array<i64: 8, 2>}, {pipeline_mode = #tpu.pipeline_mode<synchronous>, transform_indices = @transform_3, window_bounds = array<i64: 2, 64>}, {pipeline_mode = #tpu.pipeline_mode<synchronous>, transform_indices = @transform_4, window_bounds = array<i64: 1, 64>}, {pipeline_mode = #tpu.pipeline_mode<synchronous>, transform_indices = @transform_5, window_bounds = array<i64: 64, 128>}, {pipeline_mode = #tpu.pipeline_mode<synchronous>, transform_indices = @transform_6, window_bounds = array<i64: 1, 128>}, {pipeline_mode = #tpu.pipeline_mode<synchronous>, transform_indices = @transform_7, window_bounds = array<i64: 2, 64>}, {pipeline_mode = #tpu.pipeline_mode<synchronous>, transform_indices = @transform_8, window_bounds = array<i64: 1, 64>}, {pipeline_mode = #tpu.pipeline_mode<synchronous>, transform_indices = @transform_9, window_bounds = array<i64: 64, 64>}, {pipeline_mode = #tpu.pipeline_mode<synchronous>, transform_indices = @transform_10, window_bounds = array<i64: 1, 64>}, {pipeline_mode = #tpu.pipeline_mode<synchronous>, transform_indices = @transform_11, window_bounds = array<i64: 64, 128>}, {pipeline_mode = #tpu.pipeline_mode<synchronous>, transform_indices = @transform_12, window_bounds = array<i64: 1, 128>}, {pipeline_mode = #tpu.pipeline_mode<synchronous>, transform_indices = @transform_13, window_bounds = array<i64: 256, 256>}, {pipeline_mode = #tpu.pipeline_mode<synchronous>, transform_indices = @transform_14, window_bounds = array<i64: 1, 256>}, {pipeline_mode = #tpu.pipeline_mode<synchronous>, transform_indices = @transform_15, window_bounds = array<i64: 256, 512>}, {pipeline_mode = #tpu.pipeline_mode<synchronous>, transform_indices = @transform_16, window_bounds = array<i64: 1, 512>}, {transform_indices = @transform_17, window_bounds = array<i64: 8, 128>}, {transform_indices = @transform_18, window_bounds = array<i64: 8, 512>}, {transform_indices = @transform_19, window_bounds = array<i64: 8, 128>}]} {
    %0 = tpu.iota {dimensions = array<i32: 1>} : vector<8x128xi32>
    %c0 = arith.constant 0 : index
    %c0_0 = arith.constant 0 : index
    %1 = vector.load %arg1[%c0, %c0_0] : memref<8x2xi32, #tpu.memory_space<vmem>>, vector<8x2xi32>
    %2 = vector.extract_strided_slice %1 {offsets = [0, 0], sizes = [8, 1], strides = [1, 1]} : vector<8x2xi32> to vector<8x1xi32>
    %c9_i32 = arith.constant 9 : i32
    %3 = vector.broadcast %c9_i32 : i32 to vector<8x1xi32>
    %4 = arith.muli %2, %3 : vector<8x1xi32>
    %5 = vector.extract_strided_slice %1 {offsets = [0, 1], sizes = [8, 1], strides = [1, 1]} : vector<8x2xi32> to vector<8x1xi32>
    %6 = arith.addi %4, %5 : vector<8x1xi32>
    %7 = vector.broadcast %6 : vector<8x1xi32> to vector<8x128xi32>
    %8 = arith.cmpi eq, %0, %7 : vector<8x128xi32>
    %9 = arith.extui %8 : vector<8x128xi1> to vector<8x128xi32>
    %10 = arith.sitofp %9 : vector<8x128xi32> to vector<8x128xf32>
    %c0_1 = arith.constant 0 : index
    %c0_2 = arith.constant 0 : index
    %11 = vector.load %arg2[%c0_1, %c0_2] : memref<8x2xf32, #tpu.memory_space<vmem>>, vector<8x2xf32>
    %c0_3 = arith.constant 0 : index
    %c0_4 = arith.constant 0 : index
    %12 = vector.load %arg4[%c0_3, %c0_4] : memref<2x64xf32, #tpu.memory_space<vmem>>, vector<2x64xf32>
    %13 = vector.extract_strided_slice %11 {offsets = [0, 0], sizes = [8, 1], strides = [1, 1]} : vector<8x2xf32> to vector<8x1xf32>
    %14 = vector.extract_strided_slice %12 {offsets = [0, 0], sizes = [1, 64], strides = [1, 1]} : vector<2x64xf32> to vector<1x64xf32>
    %15 = vector.broadcast %13 : vector<8x1xf32> to vector<8x64xf32>
    %16 = vector.broadcast %14 : vector<1x64xf32> to vector<8x64xf32>
    %17 = arith.mulf %15, %16 : vector<8x64xf32>
    %18 = vector.extract_strided_slice %11 {offsets = [0, 1], sizes = [8, 1], strides = [1, 1]} : vector<8x2xf32> to vector<8x1xf32>
    %19 = vector.extract_strided_slice %12 {offsets = [1, 0], sizes = [1, 64], strides = [1, 1]} : vector<2x64xf32> to vector<1x64xf32>
    %20 = vector.broadcast %18 : vector<8x1xf32> to vector<8x64xf32>
    %21 = vector.broadcast %19 : vector<1x64xf32> to vector<8x64xf32>
    %22 = arith.mulf %20, %21 : vector<8x64xf32>
    %23 = arith.addf %17, %22 : vector<8x64xf32>
    %c0_5 = arith.constant 0 : index
    %c0_6 = arith.constant 0 : index
    %24 = vector.load %arg5[%c0_5, %c0_6] : memref<1x64xf32, #tpu.memory_space<vmem>>, vector<1x64xf32>
    %25 = vector.broadcast %24 : vector<1x64xf32> to vector<8x64xf32>
    %26 = arith.addf %23, %25 : vector<8x64xf32>
    %cst = arith.constant 0.000000e+00 : f32
    %27 = vector.broadcast %cst : f32 to vector<8x64xf32>
    %28 = arith.maximumf %26, %27 : vector<8x64xf32>
    %c0_7 = arith.constant 0 : index
    %c0_8 = arith.constant 0 : index
    %29 = vector.load %arg6[%c0_7, %c0_8] : memref<64x128xf32, #tpu.memory_space<vmem>>, vector<64x128xf32>
    %cst_9 = arith.constant dense<0.000000e+00> : vector<8x128xf32>
    %30 = tpu.matmul %28, %29, %cst_9 {dimension_numbers = #tpu.dot_dimension_numbers<[1], [0], [0], [1], [0, 0, 1, 1], [], []>} : vector<8x64xf32>, vector<64x128xf32>, vector<8x128xf32> -> vector<8x128xf32>
    %c0_10 = arith.constant 0 : index
    %c0_11 = arith.constant 0 : index
    %31 = vector.load %arg7[%c0_10, %c0_11] : memref<1x128xf32, #tpu.memory_space<vmem>>, vector<1x128xf32>
    %32 = vector.broadcast %31 : vector<1x128xf32> to vector<8x128xf32>
    %33 = arith.addf %30, %32 : vector<8x128xf32>
    %c0_12 = arith.constant 0 : index
    %c0_13 = arith.constant 0 : index
    %34 = vector.load %arg3[%c0_12, %c0_13] : memref<8x2xf32, #tpu.memory_space<vmem>>, vector<8x2xf32>
    %c0_14 = arith.constant 0 : index
    %c0_15 = arith.constant 0 : index
    %35 = vector.load %arg8[%c0_14, %c0_15] : memref<2x64xf32, #tpu.memory_space<vmem>>, vector<2x64xf32>
    %36 = vector.extract_strided_slice %34 {offsets = [0, 0], sizes = [8, 1], strides = [1, 1]} : vector<8x2xf32> to vector<8x1xf32>
    %37 = vector.extract_strided_slice %35 {offsets = [0, 0], sizes = [1, 64], strides = [1, 1]} : vector<2x64xf32> to vector<1x64xf32>
    %38 = vector.broadcast %36 : vector<8x1xf32> to vector<8x64xf32>
    %39 = vector.broadcast %37 : vector<1x64xf32> to vector<8x64xf32>
    %40 = arith.mulf %38, %39 : vector<8x64xf32>
    %41 = vector.extract_strided_slice %34 {offsets = [0, 1], sizes = [8, 1], strides = [1, 1]} : vector<8x2xf32> to vector<8x1xf32>
    %42 = vector.extract_strided_slice %35 {offsets = [1, 0], sizes = [1, 64], strides = [1, 1]} : vector<2x64xf32> to vector<1x64xf32>
    %43 = vector.broadcast %41 : vector<8x1xf32> to vector<8x64xf32>
    %44 = vector.broadcast %42 : vector<1x64xf32> to vector<8x64xf32>
    %45 = arith.mulf %43, %44 : vector<8x64xf32>
    %46 = arith.addf %40, %45 : vector<8x64xf32>
    %c0_16 = arith.constant 0 : index
    %c0_17 = arith.constant 0 : index
    %47 = vector.load %arg9[%c0_16, %c0_17] : memref<1x64xf32, #tpu.memory_space<vmem>>, vector<1x64xf32>
    %48 = vector.broadcast %47 : vector<1x64xf32> to vector<8x64xf32>
    %49 = arith.addf %46, %48 : vector<8x64xf32>
    %cst_18 = arith.constant 0.000000e+00 : f32
    %50 = vector.broadcast %cst_18 : f32 to vector<8x64xf32>
    %51 = arith.maximumf %49, %50 : vector<8x64xf32>
    %c0_19 = arith.constant 0 : index
    %c0_20 = arith.constant 0 : index
    %52 = vector.load %arg10[%c0_19, %c0_20] : memref<64x64xf32, #tpu.memory_space<vmem>>, vector<64x64xf32>
    %cst_21 = arith.constant dense<0.000000e+00> : vector<8x64xf32>
    %53 = tpu.matmul %51, %52, %cst_21 {dimension_numbers = #tpu.dot_dimension_numbers<[1], [0], [0], [1], [0, 0, 1, 1], [], []>} : vector<8x64xf32>, vector<64x64xf32>, vector<8x64xf32> -> vector<8x64xf32>
    %c0_22 = arith.constant 0 : index
    %c0_23 = arith.constant 0 : index
    %54 = vector.load %arg11[%c0_22, %c0_23] : memref<1x64xf32, #tpu.memory_space<vmem>>, vector<1x64xf32>
    %55 = vector.broadcast %54 : vector<1x64xf32> to vector<8x64xf32>
    %56 = arith.addf %53, %55 : vector<8x64xf32>
    %cst_24 = arith.constant 0.000000e+00 : f32
    %57 = vector.broadcast %cst_24 : f32 to vector<8x64xf32>
    %58 = arith.maximumf %56, %57 : vector<8x64xf32>
    %c0_25 = arith.constant 0 : index
    %c0_26 = arith.constant 0 : index
    %59 = vector.load %arg12[%c0_25, %c0_26] : memref<64x128xf32, #tpu.memory_space<vmem>>, vector<64x128xf32>
    %cst_27 = arith.constant dense<0.000000e+00> : vector<8x128xf32>
    %60 = tpu.matmul %58, %59, %cst_27 {dimension_numbers = #tpu.dot_dimension_numbers<[1], [0], [0], [1], [0, 0, 1, 1], [], []>} : vector<8x64xf32>, vector<64x128xf32>, vector<8x128xf32> -> vector<8x128xf32>
    %c0_28 = arith.constant 0 : index
    %c0_29 = arith.constant 0 : index
    %61 = vector.load %arg13[%c0_28, %c0_29] : memref<1x128xf32, #tpu.memory_space<vmem>>, vector<1x128xf32>
    %62 = vector.broadcast %61 : vector<1x128xf32> to vector<8x128xf32>
    %63 = arith.addf %60, %62 : vector<8x128xf32>
    %c0_30 = arith.constant 0 : index
    %c0_31 = arith.constant 0 : index
    %64 = vector.load %arg20[%c0_30, %c0_31] : memref<8x128xf32, #tpu.memory_space<vmem>>, vector<8x128xf32>
    tpu.vector_store %arg20[%c0_30, %c0_31], %63 {strides = array<i32>} : memref<8x128xf32, #tpu.memory_space<vmem>>, vector<8x128xf32>,
    %c0_32 = arith.constant 0 : index
    %c0_33 = arith.constant 0 : index
    %65 = vector.load %arg21[%c0_32, %c0_33] : memref<8x256xf32, #tpu.memory_space<vmem>>, vector<8x128xf32>
    tpu.vector_store %arg21[%c0_32, %c0_33], %10 {strides = array<i32>} : memref<8x256xf32, #tpu.memory_space<vmem>>, vector<8x128xf32>,
    %c0_34 = arith.constant 0 : index
    %c128 = arith.constant 128 : index
    %66 = vector.load %arg21[%c0_34, %c128] : memref<8x256xf32, #tpu.memory_space<vmem>>, vector<8x128xf32>
    tpu.vector_store %arg21[%c0_34, %c128], %33 {strides = array<i32>} : memref<8x256xf32, #tpu.memory_space<vmem>>, vector<8x128xf32>,
    %c0_35 = arith.constant 0 : index
    %c0_36 = arith.constant 0 : index
    %67 = vector.load %arg21[%c0_35, %c0_36] : memref<8x256xf32, #tpu.memory_space<vmem>>, vector<8x256xf32>
    %c0_37 = arith.constant 0 : index
    %c0_38 = arith.constant 0 : index
    %68 = vector.load %arg14[%c0_37, %c0_38] : memref<256x256xf32, #tpu.memory_space<vmem>>, vector<256x256xf32>
    %cst_39 = arith.constant dense<0.000000e+00> : vector<8x256xf32>
    %69 = tpu.matmul %67, %68, %cst_39 {dimension_numbers = #tpu.dot_dimension_numbers<[1], [0], [0], [1], [0, 0, 1, 1], [], []>} : vector<8x256xf32>, vector<256x256xf32>, vector<8x256xf32> -> vector<8x256xf32>
    %c0_40 = arith.constant 0 : index
    %c0_41 = arith.constant 0 : index
    %70 = vector.load %arg15[%c0_40, %c0_41] : memref<1x256xf32, #tpu.memory_space<vmem>>, vector<1x256xf32>
    %71 = vector.broadcast %70 : vector<1x256xf32> to vector<8x256xf32>
    %72 = arith.addf %69, %71 : vector<8x256xf32>
    %cst_42 = arith.constant 0.000000e+00 : f32
    %73 = vector.broadcast %cst_42 : f32 to vector<8x256xf32>
    %74 = arith.maximumf %72, %73 : vector<8x256xf32>
    %c0_43 = arith.constant 0 : index
    %c0_44 = arith.constant 0 : index
    %75 = vector.load %arg22[%c0_43, %c0_44] : memref<8x256xf32, #tpu.memory_space<vmem>>, vector<8x256xf32>
    tpu.vector_store %arg22[%c0_43, %c0_44], %74 {strides = array<i32>} : memref<8x256xf32, #tpu.memory_space<vmem>>, vector<8x256xf32>,
    %c0_45 = arith.constant 0 : index
    %c0_46 = arith.constant 0 : index
    %76 = vector.load %arg22[%c0_45, %c0_46] : memref<8x256xf32, #tpu.memory_space<vmem>>, vector<8x256xf32>
    %c0_47 = arith.constant 0 : index
    %c0_48 = arith.constant 0 : index
    %77 = vector.load %arg16[%c0_47, %c0_48] : memref<256x512xf32, #tpu.memory_space<vmem>>, vector<256x512xf32>
    %cst_49 = arith.constant dense<0.000000e+00> : vector<8x512xf32>
    %78 = tpu.matmul %76, %77, %cst_49 {dimension_numbers = #tpu.dot_dimension_numbers<[1], [0], [0], [1], [0, 0, 1, 1], [], []>} : vector<8x256xf32>, vector<256x512xf32>, vector<8x512xf32> -> vector<8x512xf32>
    %c0_50 = arith.constant 0 : index
    %c0_51 = arith.constant 0 : index
    %79 = vector.load %arg17[%c0_50, %c0_51] : memref<1x512xf32, #tpu.memory_space<vmem>>, vector<1x512xf32>
    %80 = vector.broadcast %79 : vector<1x512xf32> to vector<8x512xf32>
    %81 = arith.addf %78, %80 : vector<8x512xf32>
    %c0_52 = arith.constant 0 : index
    %c0_53 = arith.constant 0 : index
    %82 = vector.load %arg19[%c0_52, %c0_53] : memref<8x512xf32, #tpu.memory_space<vmem>>, vector<8x512xf32>
    tpu.vector_store %arg19[%c0_52, %c0_53], %81 {strides = array<i32>} : memref<8x512xf32, #tpu.memory_space<vmem>>, vector<8x512xf32>,
    %c0_54 = arith.constant 0 : index
    %c0_55 = arith.constant 0 : index
    %83 = vector.load %arg19[%c0_54, %c0_55] : memref<8x512xf32, #tpu.memory_space<vmem>>, vector<8x128xf32>
    %c0_56 = arith.constant 0 : index
    %c0_57 = arith.constant 0 : index
    %84 = vector.load %arg20[%c0_56, %c0_57] : memref<8x128xf32, #tpu.memory_space<vmem>>, vector<8x128xf32>
    %85 = arith.mulf %83, %84 : vector<8x128xf32>
    %cst_58 = arith.constant dense<0.000000e+00> : vector<8xf32>
    %86 = vector.multi_reduction <add>, %85, %cst_58 [1] : vector<8x128xf32> to vector<8xf32>
    %87 = vector.shape_cast %86 : vector<8xf32> to vector<8x1xf32>
    %c0_59 = arith.constant 0 : index
    %c0_60 = arith.constant 0 : index
    %88 = vector.load %arg18[%c0_59, %c0_60] : memref<8x128xf32, #tpu.memory_space<vmem>>, vector<8x1xf32>
    tpu.vector_store %arg18[%c0_59, %c0_60], %87 {strides = array<i32>} : memref<8x128xf32, #tpu.memory_space<vmem>>, vector<8x1xf32>,
    %c0_61 = arith.constant 0 : index
    %c128_62 = arith.constant 128 : index
    %89 = vector.load %arg19[%c0_61, %c128_62] : memref<8x512xf32, #tpu.memory_space<vmem>>, vector<8x128xf32>
    %c0_63 = arith.constant 0 : index
    %c0_64 = arith.constant 0 : index
    %90 = vector.load %arg20[%c0_63, %c0_64] : memref<8x128xf32, #tpu.memory_space<vmem>>, vector<8x128xf32>
    %91 = arith.mulf %89, %90 : vector<8x128xf32>
    %cst_65 = arith.constant dense<0.000000e+00> : vector<8xf32>
    %92 = vector.multi_reduction <add>, %91, %cst_65 [1] : vector<8x128xf32> to vector<8xf32>
    %93 = vector.shape_cast %92 : vector<8xf32> to vector<8x1xf32>
    %c0_66 = arith.constant 0 : index
    %c1 = arith.constant 1 : index
    %94 = vector.load %arg18[%c0_66, %c1] : memref<8x128xf32, #tpu.memory_space<vmem>>, vector<8x1xf32>
    tpu.vector_store %arg18[%c0_66, %c1], %93 {strides = array<i32>} : memref<8x128xf32, #tpu.memory_space<vmem>>, vector<8x1xf32>,
    %c0_67 = arith.constant 0 : index
    %c256 = arith.constant 256 : index
    %95 = vector.load %arg19[%c0_67, %c256] : memref<8x512xf32, #tpu.memory_space<vmem>>, vector<8x128xf32>
    %c0_68 = arith.constant 0 : index
    %c0_69 = arith.constant 0 : index
    %96 = vector.load %arg20[%c0_68, %c0_69] : memref<8x128xf32, #tpu.memory_space<vmem>>, vector<8x128xf32>
    %97 = arith.mulf %95, %96 : vector<8x128xf32>
    %cst_70 = arith.constant dense<0.000000e+00> : vector<8xf32>
    %98 = vector.multi_reduction <add>, %97, %cst_70 [1] : vector<8x128xf32> to vector<8xf32>
    %99 = vector.shape_cast %98 : vector<8xf32> to vector<8x1xf32>
    %c0_71 = arith.constant 0 : index
    %c2 = arith.constant 2 : index
    %100 = vector.load %arg18[%c0_71, %c2] : memref<8x128xf32, #tpu.memory_space<vmem>>, vector<8x1xf32>
    tpu.vector_store %arg18[%c0_71, %c2], %99 {strides = array<i32>} : memref<8x128xf32, #tpu.memory_space<vmem>>, vector<8x1xf32>,
    %c0_72 = arith.constant 0 : index
    %c384 = arith.constant 384 : index
    %101 = vector.load %arg19[%c0_72, %c384] : memref<8x512xf32, #tpu.memory_space<vmem>>, vector<8x128xf32>
    %c0_73 = arith.constant 0 : index
    %c0_74 = arith.constant 0 : index
    %102 = vector.load %arg20[%c0_73, %c0_74] : memref<8x128xf32, #tpu.memory_space<vmem>>, vector<8x128xf32>
    %103 = arith.mulf %101, %102 : vector<8x128xf32>
    %cst_75 = arith.constant dense<0.000000e+00> : vector<8xf32>
    %104 = vector.multi_reduction <add>, %103, %cst_75 [1] : vector<8x128xf32> to vector<8xf32>
    %105 = vector.shape_cast %104 : vector<8xf32> to vector<8x1xf32>
    %c0_76 = arith.constant 0 : index
    %c3 = arith.constant 3 : index
    %106 = vector.load %arg18[%c0_76, %c3] : memref<8x128xf32, #tpu.memory_space<vmem>>, vector<8x1xf32>
    tpu.vector_store %arg18[%c0_76, %c3], %105 {strides = array<i32>} : memref<8x128xf32, #tpu.memory_space<vmem>>, vector<8x1xf32>,
    return
  }
  func.func @transform_0(%arg0: i32) -> (i32, i32) {
    %c0_i32 = arith.constant 0 : i32
    %c0_i32_0 = arith.constant 0 : i32
    return %arg0, %c0_i32 : i32, i32
  }
  func.func @transform_1(%arg0: i32) -> (i32, i32) {
    %c0_i32 = arith.constant 0 : i32
    %c0_i32_0 = arith.constant 0 : i32
    return %arg0, %c0_i32 : i32, i32
  }
  func.func @transform_2(%arg0: i32) -> (i32, i32) {
    %c0_i32 = arith.constant 0 : i32
    %c0_i32_0 = arith.constant 0 : i32
    return %arg0, %c0_i32 : i32, i32
  }
  func.func @transform_3(%arg0: i32) -> (i32, i32) {
    %c0_i32 = arith.constant 0 : i32
    %c0_i32_0 = arith.constant 0 : i32
    %c0_i32_1 = arith.constant 0 : i32
    return %c0_i32, %c0_i32_0 : i32, i32
  }
  func.func @transform_4(%arg0: i32) -> (i32, i32) {
    %c0_i32 = arith.constant 0 : i32
    %c0_i32_0 = arith.constant 0 : i32
    %c0_i32_1 = arith.constant 0 : i32
    return %c0_i32, %c0_i32_0 : i32, i32
  }
  func.func @transform_5(%arg0: i32) -> (i32, i32) {
    %c0_i32 = arith.constant 0 : i32
    %c0_i32_0 = arith.constant 0 : i32
    %c0_i32_1 = arith.constant 0 : i32
    return %c0_i32, %c0_i32_0 : i32, i32
  }
  func.func @transform_6(%arg0: i32) -> (i32, i32) {
    %c0_i32 = arith.constant 0 : i32
    %c0_i32_0 = arith.constant 0 : i32
    %c0_i32_1 = arith.constant 0 : i32
    return %c0_i32, %c0_i32_0 : i32, i32
  }
  func.func @transform_7(%arg0: i32) -> (i32, i32) {
    %c0_i32 = arith.constant 0 : i32
    %c0_i32_0 = arith.constant 0 : i32
    %c0_i32_1 = arith.constant 0 : i32
    return %c0_i32, %c0_i32_0 : i32, i32
  }
  func.func @transform_8(%arg0: i32) -> (i32, i32) {
    %c0_i32 = arith.constant 0 : i32
    %c0_i32_0 = arith.constant 0 : i32
    %c0_i32_1 = arith.constant 0 : i32
    return %c0_i32, %c0_i32_0 : i32, i32
  }
  func.func @transform_9(%arg0: i32) -> (i32, i32) {
    %c0_i32 = arith.constant 0 : i32
    %c0_i32_0 = arith.constant 0 : i32
    %c0_i32_1 = arith.constant 0 : i32
    return %c0_i32, %c0_i32_0 : i32, i32
  }
  func.func @transform_10(%arg0: i32) -> (i32, i32) {
    %c0_i32 = arith.constant 0 : i32
    %c0_i32_0 = arith.constant 0 : i32
    %c0_i32_1 = arith.constant 0 : i32
    return %c0_i32, %c0_i32_0 : i32, i32
  }
  func.func @transform_11(%arg0: i32) -> (i32, i32) {
    %c0_i32 = arith.constant 0 : i32
    %c0_i32_0 = arith.constant 0 : i32
    %c0_i32_1 = arith.constant 0 : i32
    return %c0_i32, %c0_i32_0 : i32, i32
  }
  func.func @transform_12(%arg0: i32) -> (i32, i32) {
    %c0_i32 = arith.constant 0 : i32
    %c0_i32_0 = arith.constant 0 : i32
    %c0_i32_1 = arith.constant 0 : i32
    return %c0_i32, %c0_i32_0 : i32, i32
  }
  func.func @transform_13(%arg0: i32) -> (i32, i32) {
    %c0_i32 = arith.constant 0 : i32
    %c0_i32_0 = arith.constant 0 : i32
    %c0_i32_1 = arith.constant 0 : i32
    return %c0_i32, %c0_i32_0 : i32, i32
  }
  func.func @transform_14(%arg0: i32) -> (i32, i32) {
    %c0_i32 = arith.constant 0 : i32
    %c0_i32_0 = arith.constant 0 : i32
    %c0_i32_1 = arith.constant 0 : i32
    return %c0_i32, %c0_i32_0 : i32, i32
  }
  func.func @transform_15(%arg0: i32) -> (i32, i32) {
    %c0_i32 = arith.constant 0 : i32
    %c0_i32_0 = arith.constant 0 : i32
    %c0_i32_1 = arith.constant 0 : i32
    return %c0_i32, %c0_i32_0 : i32, i32
  }
  func.func @transform_16(%arg0: i32) -> (i32, i32) {
    %c0_i32 = arith.constant 0 : i32
    %c0_i32_0 = arith.constant 0 : i32
    %c0_i32_1 = arith.constant 0 : i32
    return %c0_i32, %c0_i32_0 : i32, i32
  }
  func.func @transform_17(%arg0: i32) -> (i32, i32) {
    %c0_i32 = arith.constant 0 : i32
    %c0_i32_0 = arith.constant 0 : i32
    return %arg0, %c0_i32 : i32, i32
  }
  func.func @transform_18(%arg0: i32) -> (i32, i32) {
    %c0_i32 = arith.constant 0 : i32
    %c0_i32_0 = arith.constant 0 : i32
    return %arg0, %c0_i32 : i32, i32
  }
  func.func @transform_19(%arg0: i32) -> (i32, i32) {
    %c0_i32 = arith.constant 0 : i32
    %c0_i32_0 = arith.constant 0 : i32
    return %arg0, %c0_i32 : i32, i32
  }
}

</mosaic_0001>

<llo_original>
// kernel: state_goal_usf_forward.1
$region0: #{state_goal_usf_forward.1}
  #allocation0 [shape = 'u32[]', space=smem, size = 0x4, offset = 0x4, fixed_abs, tag = 'smem constant byte address 0x4 - core index']
  #allocation1 [shape = 'u32[144,128]{1,0:T(1,128)}', space=vmem, size = 0x12000, scoped, tag = 'internal scratch']
  #allocation2 [shape = 'f32[8,256]{1,0:T(8,128)}', space=vmem, size = 0x2000, scoped, tag = 'scratch operand']
  #allocation3 [shape = 'f32[8,256]{1,0:T(8,128)}', space=vmem, size = 0x2000, scoped, tag = 'scratch operand']
  %s0 = inlined_call_operand.vmem [shape: s32[8,2], index: 0, kind: input, shape index: {}]
  %s1 = inlined_call_operand.vmem [shape: f32[8,2], index: 1, kind: input, shape index: {}]
  %s2 = inlined_call_operand.vmem [shape: f32[8,2], index: 2, kind: input, shape index: {}]
  %s3 = inlined_call_operand.vmem [shape: f32[2,64], index: 3, kind: input, shape index: {}]
  %s4 = inlined_call_operand.vmem [shape: f32[1,64], index: 4, kind: input, shape index: {}]
  %s5 = inlined_call_operand.vmem [shape: f32[64,128], index: 5, kind: input, shape index: {}]
  %s6 = inlined_call_operand.hbm [shape: f32[1,128], index: 6, kind: input, shape index: {}]
  %s7 = inlined_call_operand.hbm [shape: f32[2,64], index: 7, kind: input, shape index: {}]
  %s8 = inlined_call_operand.hbm [shape: f32[1,64], index: 8, kind: input, shape index: {}]
  %s9 = inlined_call_operand.hbm [shape: f32[64,64], index: 9, kind: input, shape index: {}]
  %s10 = inlined_call_operand.hbm [shape: f32[1,64], index: 10, kind: input, shape index: {}]
  %s11 = inlined_call_operand.hbm [shape: f32[64,128], index: 11, kind: input, shape index: {}]
  %s12 = inlined_call_operand.hbm [shape: f32[1,128], index: 12, kind: input, shape index: {}]
  %s13 = inlined_call_operand.hbm [shape: f32[256,256], index: 13, kind: input, shape index: {}]
  %s14 = inlined_call_operand.hbm [shape: f32[1,256], index: 14, kind: input, shape index: {}]
  %s15 = inlined_call_operand.hbm [shape: f32[256,512], index: 15, kind: input, shape index: {}]
  %s16 = inlined_call_operand.vmem [shape: f32[1,512], index: 16, kind: input, shape index: {}]
  %s17 = inlined_call_operand.vmem [shape: f32[8,128], index: 17, kind: output, shape index: {0}]
  %s18 = inlined_call_operand.vmem [shape: f32[8,512], index: 18, kind: output, shape index: {1}]
  %s19 = inlined_call_operand.hbm [shape: f32[8,128], index: 19, kind: output, shape index: {2}]
  %20 = xla_tuple %s17, %s18, %s19
  %s21 = sld [smem:[#allocation0]]
  $region134: #{state_goal_usf_forward.1} parent=0
    _
  %s23 = ssub.s32 1, %s21
  %s24 = scalar_select 0, %s23, %s21
  $region1: #{state_goal_usf_forward.1} parent=0
    #allocation4 [shape = 'u8[512]{0}', space=vmem, size = 0x400, scoped, tag = 'input window, operand 6, single buffered']
    #allocation5 [shape = 's32[1]{0}', space=sflag, size = 0x4, scoped, tag = 'scoped memory for state_goal_usf_forward.1']
    #allocation6 [shape = 's32[1]{0}', space=sflag, size = 0x4, scoped, tag = 'scoped memory for state_goal_usf_forward.1']
    #allocation7 [shape = 'u8[1024]{0}', space=vmem, size = 0x400, scoped, tag = 'input window, operand 7, single buffered']
    #allocation8 [shape = 's32[1]{0}', space=sflag, size = 0x4, scoped, tag = 'scoped memory for state_goal_usf_forward.1']
    #allocation9 [shape = 'u8[512]{0}', space=vmem, size = 0x400, scoped, tag = 'input window, operand 8, single buffered']
    #allocation10 [shape = 'u8[32768]{0}', space=vmem, size = 0x8000, scoped, tag = 'input window, operand 9, single buffered']
    #allocation11 [shape = 's32[1]{0}', space=sflag, size = 0x4, scoped, tag = 'scoped memory for state_goal_usf_forward.1']
    #allocation12 [shape = 'u8[512]{0}', space=vmem, size = 0x400, scoped, tag = 'input window, operand 10, single buffered']
    #allocation13 [shape = 'u8[32768]{0}', space=vmem, size = 0x8000, scoped, tag = 'input window, operand 11, single buffered']
    #allocation14 [shape = 's32[1]{0}', space=sflag, size = 0x4, scoped, tag = 'scoped memory for state_goal_usf_forward.1']
    #allocation15 [shape = 'u8[512]{0}', space=vmem, size = 0x400, scoped, tag = 'input window, operand 12, single buffered']
    #allocation16 [shape = 'u8[262144]{0}', space=vmem, size = 0x40000, scoped, tag = 'input window, operand 13, single buffered']
    #allocation17 [shape = 's32[1]{0}', space=sflag, size = 0x4, scoped, tag = 'scoped memory for state_goal_usf_forward.1']
    #allocation18 [shape = 'u8[1024]{0}', space=vmem, size = 0x400, scoped, tag = 'input window, operand 14, single buffered']
    #allocation19 [shape = 'u8[524288]{0}', space=vmem, size = 0x80000, scoped, tag = 'input window, operand 15, single buffered']
    #allocation20 [shape = 's32[1]{0}', space=sflag, size = 0x4, scoped, tag = 'scoped memory for state_goal_usf_forward.1']
    #allocation21 [shape = 'u8[4096]{0}', space=vmem, size = 0x1000, scoped, tag = 'output window, operand 2, single buffered']
    %25 = vsyncpa [#allocation5], 0
    %26 = vsyncpa [#allocation8], 0
    %27 = vsyncpa [#allocation11], 0
    %28 = vsyncpa [#allocation14], 0
    %29 = vsyncpa [#allocation17], 0
    %30 = vsyncpa [#allocation20], 0
    %31 = vsyncpa [#allocation6], 0
    // Predicated region
    $region2: #{state_goal_usf_forward.1} parent=1 // pred_check
      _
    $region3: #{state_goal_usf_forward.1} parent=1 // pred_check_branch
      %33 = sbr.rel (0) target = $region5
    $region4: #{state_goal_usf_forward.1} parent=1 // pred_region
      _
    $region5: #{state_goal_usf_forward.1} parent=1 // pred_fallthru
      _
    // Predicated region
    $region6: #{state_goal_usf_forward.1} parent=1 // pred_check
      _
    $region7: #{state_goal_usf_forward.1} parent=1 // pred_check_branch
      %35 = sbr.rel (0) target = $region9
    $region8: #{state_goal_usf_forward.1} parent=1 // pred_region
      _
    $region9: #{state_goal_usf_forward.1} parent=1 // pred_fallthru
      _
    // Predicated region
    $region10: #{state_goal_usf_forward.1} parent=1 // pred_check
      _
    $region11: #{state_goal_usf_forward.1} parent=1 // pred_check_branch
      %37 = sbr.rel (0) target = $region13
    $region12: #{state_goal_usf_forward.1} parent=1 // pred_region
      _
    $region13: #{state_goal_usf_forward.1} parent=1 // pred_fallthru
      _
    // Predicated region
    $region14: #{state_goal_usf_forward.1} parent=1 // pred_check
      _
    $region15: #{state_goal_usf_forward.1} parent=1 // pred_check_branch
      %39 = sbr.rel (0) target = $region17
    $region16: #{state_goal_usf_forward.1} parent=1 // pred_region
      _
    $region17: #{state_goal_usf_forward.1} parent=1 // pred_fallthru
      _
    // Predicated region
    $region18: #{state_goal_usf_forward.1} parent=1 // pred_check
      _
    $region19: #{state_goal_usf_forward.1} parent=1 // pred_check_branch
      %41 = sbr.rel (0) target = $region21
    $region20: #{state_goal_usf_forward.1} parent=1 // pred_region
      _
    $region21: #{state_goal_usf_forward.1} parent=1 // pred_fallthru
      _
    // Predicated region
    $region22: #{state_goal_usf_forward.1} parent=1 // pred_check
      _
    $region23: #{state_goal_usf_forward.1} parent=1 // pred_check_branch
      %43 = sbr.rel (0) target = $region25
    $region24: #{state_goal_usf_forward.1} parent=1 // pred_region
      _
    $region25: #{state_goal_usf_forward.1} parent=1 // pred_fallthru
      _
    // Predicated region
    $region26: #{state_goal_usf_forward.1} parent=1 // pred_check
      _
    $region27: #{state_goal_usf_forward.1} parent=1 // pred_check_branch
      %45 = sbr.rel (0) target = $region29
    $region28: #{state_goal_usf_forward.1} parent=1 // pred_region
      %s47 = ssub.s32 16, 16
      %48 = vsyncadd [#allocation5], %s47
      %s50 = sshll.u32 [#allocation4], 4
      %s51 = int_to_ptr.vmem [resolvable:$true] %s50
      %53 = dma.hbm_to_vmem [thread:$0]  %s6, 16, %s51, [#allocation5]
    $region29: #{state_goal_usf_forward.1} parent=1 // pred_fallthru
      _
    // Predicated region
    $region30: #{state_goal_usf_forward.1} parent=1 // pred_check
      _
    $region31: #{state_goal_usf_forward.1} parent=1 // pred_check_branch
      %55 = sbr.rel (0) target = $region33
    $region32: #{state_goal_usf_forward.1} parent=1 // pred_region
      %s57 = ssub.s32 32, 32
      %58 = vsyncadd [#allocation8], %s57
      %s60 = sshll.u32 [#allocation7], 4
      %s61 = int_to_ptr.vmem [resolvable:$true] %s60
      %63 = dma.hbm_to_vmem [thread:$0]  %s7, 32, %s61, [#allocation8]
    $region33: #{state_goal_usf_forward.1} parent=1 // pred_fallthru
      _
    // Predicated region
    $region34: #{state_goal_usf_forward.1} parent=1 // pred_check
      _
    $region35: #{state_goal_usf_forward.1} parent=1 // pred_check_branch
      %65 = sbr.rel (0) target = $region37
    $region36: #{state_goal_usf_forward.1} parent=1 // pred_region
      %s67 = ssub.s32 16, 16
      %68 = vsyncadd [#allocation8], %s67
      %s70 = sshll.u32 [#allocation9], 4
      %s71 = int_to_ptr.vmem [resolvable:$true] %s70
      %73 = dma.hbm_to_vmem [thread:$0]  %s8, 16, %s71, [#allocation8]
    $region37: #{state_goal_usf_forward.1} parent=1 // pred_fallthru
      _
    // Predicated region
    $region38: #{state_goal_usf_forward.1} parent=1 // pred_check
      _
    $region39: #{state_goal_usf_forward.1} parent=1 // pred_check_branch
      %75 = sbr.rel (0) target = $region41
    $region40: #{state_goal_usf_forward.1} parent=1 // pred_region
      %s77 = ssub.s32 1024, 1024
      %78 = vsyncadd [#allocation11], %s77
      %s79 = sshll.u32 [#allocation10], 4
      %s80 = int_to_ptr.vmem [resolvable:$true] %s79
      %85 = dma.hbm_to_vmem [thread:$0]  %s9, 1024, %s80, [#allocation11], 128, 128, 8
    $region41: #{state_goal_usf_forward.1} parent=1 // pred_fallthru
      _
    // Predicated region
    $region42: #{state_goal_usf_forward.1} parent=1 // pred_check
      _
    $region43: #{state_goal_usf_forward.1} parent=1 // pred_check_branch
      %87 = sbr.rel (0) target = $region45
    $region44: #{state_goal_usf_forward.1} parent=1 // pred_region
      %s89 = ssub.s32 16, 16
      %90 = vsyncadd [#allocation11], %s89
      %s92 = sshll.u32 [#allocation12], 4
      %s93 = int_to_ptr.vmem [resolvable:$true] %s92
      %95 = dma.hbm_to_vmem [thread:$0]  %s10, 16, %s93, [#allocation11]
    $region45: #{state_goal_usf_forward.1} parent=1 // pred_fallthru
      _
    // Predicated region
    $region46: #{state_goal_usf_forward.1} parent=1 // pred_check
      _
    $region47: #{state_goal_usf_forward.1} parent=1 // pred_check_branch
      %97 = sbr.rel (0) target = $region49
    $region48: #{state_goal_usf_forward.1} parent=1 // pred_region
      %s99 = ssub.s32 1024, 1024
      %100 = vsyncadd [#allocation14], %s99
      %s101 = sshll.u32 [#allocation13], 4
      %s102 = int_to_ptr.vmem [resolvable:$true] %s101
      %107 = dma.hbm_to_vmem [thread:$0]  %s11, 1024, %s102, [#allocation14], 128, 128, 8
    $region49: #{state_goal_usf_forward.1} parent=1 // pred_fallthru
      _
    // Predicated region
    $region50: #{state_goal_usf_forward.1} parent=1 // pred_check
      _
    $region51: #{state_goal_usf_forward.1} parent=1 // pred_check_branch
      %109 = sbr.rel (0) target = $region53
    $region52: #{state_goal_usf_forward.1} parent=1 // pred_region
      %s111 = ssub.s32 16, 16
      %112 = vsyncadd [#allocation14], %s111
      %s114 = sshll.u32 [#allocation15], 4
      %s115 = int_to_ptr.vmem [resolvable:$true] %s114
      %117 = dma.hbm_to_vmem [thread:$0]  %s12, 16, %s115, [#allocation14]
    $region53: #{state_goal_usf_forward.1} parent=1 // pred_fallthru
      _
    // Predicated region
    $region54: #{state_goal_usf_forward.1} parent=1 // pred_check
      _
    $region55: #{state_goal_usf_forward.1} parent=1 // pred_check_branch
      %119 = sbr.rel (0) target = $region57
    $region56: #{state_goal_usf_forward.1} parent=1 // pred_region
      %s121 = ssub.s32 8192, 8192
      %122 = vsyncadd [#allocation17], %s121
      %s123 = sshll.u32 [#allocation16], 4
      %s124 = int_to_ptr.vmem [resolvable:$true] %s123
      %129 = dma.hbm_to_vmem [thread:$0]  %s13, 8192, %s124, [#allocation17], 256, 256, 16
    $region57: #{state_goal_usf_forward.1} parent=1 // pred_fallthru
      _
    // Predicated region
    $region58: #{state_goal_usf_forward.1} parent=1 // pred_check
      _
    $region59: #{state_goal_usf_forward.1} parent=1 // pred_check_branch
      %131 = sbr.rel (0) target = $region61
    $region60: #{state_goal_usf_forward.1} parent=1 // pred_region
      %s133 = ssub.s32 32, 32
      %134 = vsyncadd [#allocation17], %s133
      %s136 = sshll.u32 [#allocation18], 4
      %s137 = int_to_ptr.vmem [resolvable:$true] %s136
      %139 = dma.hbm_to_vmem [thread:$0]  %s14, 32, %s137, [#allocation17]
    $region61: #{state_goal_usf_forward.1} parent=1 // pred_fallthru
      _
    // Predicated region
    $region62: #{state_goal_usf_forward.1} parent=1 // pred_check
      _
    $region63: #{state_goal_usf_forward.1} parent=1 // pred_check_branch
      %141 = sbr.rel (0) target = $region65
    $region64: #{state_goal_usf_forward.1} parent=1 // pred_region
      %s143 = ssub.s32 16384, 16384
      %144 = vsyncadd [#allocation20], %s143
      %s145 = sshll.u32 [#allocation19], 4
      %s146 = int_to_ptr.vmem [resolvable:$true] %s145
      %151 = dma.hbm_to_vmem [thread:$0]  %s15, 16384, %s146, [#allocation20], 512, 512, 32
    $region65: #{state_goal_usf_forward.1} parent=1 // pred_fallthru
      _
    // Predicated region
    $region66: #{state_goal_usf_forward.1} parent=1 // pred_check
      _
    $region67: #{state_goal_usf_forward.1} parent=1 // pred_check_branch
      %153 = sbr.rel (0) target = $region69
    $region68: #{state_goal_usf_forward.1} parent=1 // pred_region
      _
    $region69: #{state_goal_usf_forward.1} parent=1 // pred_fallthru
      _
    // Predicated region
    $region70: #{state_goal_usf_forward.1} parent=1 // pred_check
      _
    $region71: #{state_goal_usf_forward.1} parent=1 // pred_check_branch
      %155 = sbr.rel (0) target = $region73
    $region72: #{state_goal_usf_forward.1} parent=1 // pred_region
      %156 = dma.done [#allocation5], 16
    $region73: #{state_goal_usf_forward.1} parent=1 // pred_fallthru
      _
    // Predicated region
    $region74: #{state_goal_usf_forward.1} parent=1 // pred_check
      _
    $region75: #{state_goal_usf_forward.1} parent=1 // pred_check_branch
      %158 = sbr.rel (0) target = $region77
    $region76: #{state_goal_usf_forward.1} parent=1 // pred_region
      %159 = dma.done [#allocation8], 32
    $region77: #{state_goal_usf_forward.1} parent=1 // pred_fallthru
      _
    // Predicated region
    $region78: #{state_goal_usf_forward.1} parent=1 // pred_check
      _
    $region79: #{state_goal_usf_forward.1} parent=1 // pred_check_branch
      %161 = sbr.rel (0) target = $region81
    $region80: #{state_goal_usf_forward.1} parent=1 // pred_region
      %162 = dma.done [#allocation8], 16
    $region81: #{state_goal_usf_forward.1} parent=1 // pred_fallthru
      _
    // Predicated region
    $region82: #{state_goal_usf_forward.1} parent=1 // pred_check
      _
    $region83: #{state_goal_usf_forward.1} parent=1 // pred_check_branch
      %164 = sbr.rel (0) target = $region85
    $region84: #{state_goal_usf_forward.1} parent=1 // pred_region
      %165 = dma.done [#allocation11], 1024
    $region85: #{state_goal_usf_forward.1} parent=1 // pred_fallthru
      _
    // Predicated region
    $region86: #{state_goal_usf_forward.1} parent=1 // pred_check
      _
    $region87: #{state_goal_usf_forward.1} parent=1 // pred_check_branch
      %167 = sbr.rel (0) target = $region89
    $region88: #{state_goal_usf_forward.1} parent=1 // pred_region
      %168 = dma.done [#allocation11], 16
    $region89: #{state_goal_usf_forward.1} parent=1 // pred_fallthru
      _
    // Predicated region
    $region90: #{state_goal_usf_forward.1} parent=1 // pred_check
      _
    $region91: #{state_goal_usf_forward.1} parent=1 // pred_check_branch
      %170 = sbr.rel (0) target = $region93
    $region92: #{state_goal_usf_forward.1} parent=1 // pred_region
      %171 = dma.done [#allocation14], 1024
    $region93: #{state_goal_usf_forward.1} parent=1 // pred_fallthru
      _
    // Predicated region
    $region94: #{state_goal_usf_forward.1} parent=1 // pred_check
      _
    $region95: #{state_goal_usf_forward.1} parent=1 // pred_check_branch
      %173 = sbr.rel (0) target = $region97
    $region96: #{state_goal_usf_forward.1} parent=1 // pred_region
      %174 = dma.done [#allocation14], 16
    $region97: #{state_goal_usf_forward.1} parent=1 // pred_fallthru
      _
    // Predicated region
    $region98: #{state_goal_usf_forward.1} parent=1 // pred_check
      _
    $region99: #{state_goal_usf_forward.1} parent=1 // pred_check_branch
      %176 = sbr.rel (0) target = $region101
    $region100: #{state_goal_usf_forward.1} parent=1 // pred_region
      %177 = dma.done [#allocation17], 8192
    $region101: #{state_goal_usf_forward.1} parent=1 // pred_fallthru
      _
    // Predicated region
    $region102: #{state_goal_usf_forward.1} parent=1 // pred_check
      _
    $region103: #{state_goal_usf_forward.1} parent=1 // pred_check_branch
      %179 = sbr.rel (0) target = $region105
    $region104: #{state_goal_usf_forward.1} parent=1 // pred_region
      %180 = dma.done [#allocation17], 32
    $region105: #{state_goal_usf_forward.1} parent=1 // pred_fallthru
      _
    // Predicated region
    $region106: #{state_goal_usf_forward.1} parent=1 // pred_check
      _
    $region107: #{state_goal_usf_forward.1} parent=1 // pred_check_branch
      %182 = sbr.rel (0) target = $region109
    $region108: #{state_goal_usf_forward.1} parent=1 // pred_region
      %183 = dma.done [#allocation20], 16384
    $region109: #{state_goal_usf_forward.1} parent=1 // pred_fallthru
      _
    %v184 = vlaneseq
    %v185 = vand.u32 %v184, 127
    %v186 = vld [vmem:[%s0] sm:$0xff]
    %v187 = vmul.u32 %v186, 9
    %188 = vrot.lane.b32.xlu0 %v186, 127
    %v189 = vpop.permute.xlu0 %188
    %v190 = vadd.s32 %v187, %v189
    %191 = vset.pattern.permute.xlu0 0
    %192 = vperm.xlu0 %191, %v190
    %v193 = vpop.permute.xlu0 %192
    %vm194 = vcmp.eq.s32.totalorder %v185, %v193
    %v195 = vsel %vm194, 1, 0
    %v196 = vcvt.s32.f32 %v195
    %v197 = vld [vmem:[%s1] sm:$0xff]
    %v198 = vld [vmem:[%s3] sm:$0x3]
    %200 = vset.pattern.permute.xlu0 0
    %201 = vperm.xlu0 %200, %v197
    %v202 = vpop.permute.xlu0 %201
    %v204 = vlaneseq
    %v205 = vshrl.u32 %v204, 7
    %v206 = vsub.s32 0, %v205
    %v207 = vrot.slane %v198, %v206
    %v208 = vmul.f32 %v202, %v207
    %209 = vset.pattern.permute.xlu0 1
    %210 = vperm.xlu0 %209, %v197
    %v211 = vpop.permute.xlu0 %210
    %v213 = vlaneseq
    %v214 = vshrl.u32 %v213, 7
    %v215 = vsub.s32 1, %v214
    %v216 = vrot.slane %v198, %v215
    %v217 = vmul.f32 %v211, %v216
    %v218 = vadd.f32 %v208, %v217
    %v219 = vld [vmem:[%s4] sm:$0x1]
    %v221 = vlaneseq
    %v222 = vshrl.u32 %v221, 7
    %v223 = vsub.s32 0, %v222
    %v224 = vrot.slane %v219, %v223
    %v226 = vadd.f32 %v218, %v224
    %v227 = vmax.f32 %v226, 0.0
    %v228 = vld [vmem:[%s5] sm:$0xff]
    %v229 = vld [vmem:[%s5 + $0x8] sm:$0xff]
    %v230 = vld [vmem:[%s5 + $0x10] sm:$0xff]
    %v231 = vld [vmem:[%s5 + $0x18] sm:$0xff]
    %v232 = vld [vmem:[%s5 + $0x20] sm:$0xff]
    %v233 = vld [vmem:[%s5 + $0x28] sm:$0xff]
    %v234 = vld [vmem:[%s5 + $0x30] sm:$0xff]
    %v235 = vld [vmem:[%s5 + $0x38] sm:$0xff]
    %v236 = vld [vmem:[#allocation4] sm:$0x1]
    %v238 = vlaneseq
    %v239 = vshrl.u32 %v238, 7
    %v240 = vsub.s32 0, %v239
    %v241 = vrot.slane %v236, %v240
    %vm243 = vcmask 523264
    %v245 = vsel %vm243, %v227, 0
    %247 = vmatprep.subr.mxu0 0.0
    %248 = vmatpush1.msra.mxu0 %v228
    %249 = vmatprep.subr.mxu0 0.0
    %250 = vmatpush1.msra.mxu0 %v229
    %251 = vmatprep.subr.mxu0 0.0
    %252 = vmatpush1.msra.mxu0 %v230
    %253 = vmatprep.subr.mxu0 0.0
    %254 = vmatpush1.msra.mxu0 %v231
    %255 = vmatprep.subr.mxu0 0.0
    %256 = vmatpush1.msra.mxu0 %v232
    %257 = vmatprep.subr.mxu0 0.0
    %258 = vmatpush1.msra.mxu0 %v233
    %259 = vmatprep.subr.mxu0 0.0
    %260 = vmatpush1.msra.mxu0 %v234
    %261 = vmatprep.subr.mxu0 0.0
    %262 = vmatpush1.msra.mxu0 %v235
    %263 = vmatprep.subr.mxu0 0.0
    %264 = vmatpush1.msra.mxu0 0.0
    %265 = vmatprep.subr.mxu0 0.0
    %266 = vmatpush1.msra.mxu0 0.0
    %267 = vmatprep.subr.mxu0 0.0
    %268 = vmatpush1.msra.mxu0 0.0
    %269 = vmatprep.subr.mxu0 0.0
    %270 = vmatpush1.msra.mxu0 0.0
    %271 = vmatprep.subr.mxu0 0.0
    %272 = vmatpush1.msra.mxu0 0.0
    %273 = vmatprep.subr.mxu0 0.0
    %274 = vmatpush1.msra.mxu0 0.0
    %275 = vmatprep.subr.mxu0 0.0
    %276 = vmatpush1.msra.mxu0 0.0
    %277 = vmatprep.subr.mxu0 0.0
    %278 = vmatpush1.msra.mxu0 0.0
    %279 = vmatprep.subr.mxu0 0.0
    %280 = vmatpush1.msra.mxu0 0.0
    %281 = vmatprep.subr.mxu0 0.0
    %282 = vmatpush1.msra.mxu0 0.0
    %283 = vmatprep.subr.mxu0 0.0
    %284 = vmatpush1.msra.mxu0 0.0
    %285 = vmatprep.subr.mxu0 0.0
    %286 = vmatpush1.msra.mxu0 0.0
    %287 = vmatprep.subr.mxu0 0.0
    %288 = vmatpush1.msra.mxu0 0.0
    %289 = vmatprep.subr.mxu0 0.0
    %290 = vmatpush1.msra.mxu0 0.0
    %291 = vmatprep.subr.mxu0 0.0
    %292 = vmatpush1.msra.mxu0 0.0
    %293 = vmatprep.subr.mxu0 0.0
    %294 = vmatpush1.msra.mxu0 0.0
    %295 = vmatprep.subr.mxu0 0.0
    %296 = vmatpush1.msra.mxu0 0.0
    %297 = vmatprep.subr.mxu0 0.0
    %298 = vmatpush1.msra.mxu0 0.0
    %299 = vmatprep.subr.mxu0 0.0
    %300 = vmatpush1.msra.mxu0 0.0
    %301 = vmatprep.subr.mxu0 0.0
    %302 = vmatpush1.msra.mxu0 0.0
    %303 = vmatprep.subr.mxu0 0.0
    %304 = vmatpush1.msra.mxu0 0.0
    %305 = vmatprep.subr.mxu0 0.0
    %306 = vmatpush1.msra.mxu0 0.0
    %307 = vmatprep.subr.mxu0 0.0
    %308 = vmatpush1.msra.mxu0 0.0
    %309 = vmatprep.subr.mxu0 0.0
    %310 = vmatpush1.msra.mxu0 0.0
    %311 = vmatprep.mubr.f32.mxu0 0.0
    %312 = vmatmul.mubr.f32.gmra.mrb[0].mxu0 %v245
    %v313 = vpop.f32.mrb[0].mxu0
    %v314 = vadd.f32 %v241, %v313
    %v315 = vpop.f32.mrb[0].mxu0
    %316 = vdwg.mxu0
    %v317 = vld [vmem:[%s2] sm:$0xff]
    %v318 = vld [vmem:[#allocation7] sm:$0x3]
    %320 = vset.pattern.permute.xlu0 0
    %321 = vperm.xlu0 %320, %v317
    %v322 = vpop.permute.xlu0 %321
    %v324 = vlaneseq
    %v325 = vshrl.u32 %v324, 7
    %v326 = vsub.s32 0, %v325
    %v327 = vrot.slane %v318, %v326
    %v328 = vmul.f32 %v322, %v327
    %329 = vset.pattern.permute.xlu0 1
    %330 = vperm.xlu0 %329, %v317
    %v331 = vpop.permute.xlu0 %330
    %v333 = vlaneseq
    %v334 = vshrl.u32 %v333, 7
    %v335 = vsub.s32 1, %v334
    %v336 = vrot.slane %v318, %v335
    %v337 = vmul.f32 %v331, %v336
    %v338 = vadd.f32 %v328, %v337
    %v339 = vld [vmem:[#allocation9] sm:$0x1]
    %v341 = vlaneseq
    %v342 = vshrl.u32 %v341, 7
    %v343 = vsub.s32 0, %v342
    %v344 = vrot.slane %v339, %v343
    %v346 = vadd.f32 %v338, %v344
    %v347 = vmax.f32 %v346, 0.0
    %v348 = vld [vmem:[#allocation10] sm:$0xff]
    %v349 = vld [vmem:[#allocation10 + $0x8] sm:$0xff]
    %v350 = vld [vmem:[#allocation10 + $0x10] sm:$0xff]
    %v351 = vld [vmem:[#allocation10 + $0x18] sm:$0xff]
    %v352 = vld [vmem:[#allocation10 + $0x20] sm:$0xff]
    %v353 = vld [vmem:[#allocation10 + $0x28] sm:$0xff]
    %v354 = vld [vmem:[#allocation10 + $0x30] sm:$0xff]
    %v355 = vld [vmem:[#allocation10 + $0x38] sm:$0xff]
    %v356 = vld [vmem:[#allocation12] sm:$0x1]
    %v358 = vlaneseq
    %v359 = vshrl.u32 %v358, 7
    %v360 = vsub.s32 0, %v359
    %v361 = vrot.slane %v356, %v360
    %v364 = vsel %vm243, %v347, 0
    %366 = vmatprep.subr.mxu0 0.0
    %367 = vmatpush1.msra.mxu0 %v348
    %368 = vmatprep.subr.mxu0 0.0
    %369 = vmatpush1.msra.mxu0 %v349
    %370 = vmatprep.subr.mxu0 0.0
    %371 = vmatpush1.msra.mxu0 %v350
    %372 = vmatprep.subr.mxu0 0.0
    %373 = vmatpush1.msra.mxu0 %v351
    %374 = vmatprep.subr.mxu0 0.0
    %375 = vmatpush1.msra.mxu0 %v352
    %376 = vmatprep.subr.mxu0 0.0
    %377 = vmatpush1.msra.mxu0 %v353
    %378 = vmatprep.subr.mxu0 0.0
    %379 = vmatpush1.msra.mxu0 %v354
    %380 = vmatprep.subr.mxu0 0.0
    %381 = vmatpush1.msra.mxu0 %v355
    %382 = vmatprep.subr.mxu0 0.0
    %383 = vmatpush1.msra.mxu0 0.0
    %384 = vmatprep.subr.mxu0 0.0
    %385 = vmatpush1.msra.mxu0 0.0
    %386 = vmatprep.subr.mxu0 0.0
    %387 = vmatpush1.msra.mxu0 0.0
    %388 = vmatprep.subr.mxu0 0.0
    %389 = vmatpush1.msra.mxu0 0.0
    %390 = vmatprep.subr.mxu0 0.0
    %391 = vmatpush1.msra.mxu0 0.0
    %392 = vmatprep.subr.mxu0 0.0
    %393 = vmatpush1.msra.mxu0 0.0
    %394 = vmatprep.subr.mxu0 0.0
    %395 = vmatpush1.msra.mxu0 0.0
    %396 = vmatprep.subr.mxu0 0.0
    %397 = vmatpush1.msra.mxu0 0.0
    %398 = vmatprep.subr.mxu0 0.0
    %399 = vmatpush1.msra.mxu0 0.0
    %400 = vmatprep.subr.mxu0 0.0
    %401 = vmatpush1.msra.mxu0 0.0
    %402 = vmatprep.subr.mxu0 0.0
    %403 = vmatpush1.msra.mxu0 0.0
    %404 = vmatprep.subr.mxu0 0.0
    %405 = vmatpush1.msra.mxu0 0.0
    %406 = vmatprep.subr.mxu0 0.0
    %407 = vmatpush1.msra.mxu0 0.0
    %408 = vmatprep.subr.mxu0 0.0
    %409 = vmatpush1.msra.mxu0 0.0
    %410 = vmatprep.subr.mxu0 0.0
    %411 = vmatpush1.msra.mxu0 0.0
    %412 = vmatprep.subr.mxu0 0.0
    %413 = vmatpush1.msra.mxu0 0.0
    %414 = vmatprep.subr.mxu0 0.0
    %415 = vmatpush1.msra.mxu0 0.0
    %416 = vmatprep.subr.mxu0 0.0
    %417 = vmatpush1.msra.mxu0 0.0
    %418 = vmatprep.subr.mxu0 0.0
    %419 = vmatpush1.msra.mxu0 0.0
    %420 = vmatprep.subr.mxu0 0.0
    %421 = vmatpush1.msra.mxu0 0.0
    %422 = vmatprep.subr.mxu0 0.0
    %423 = vmatpush1.msra.mxu0 0.0
    %424 = vmatprep.subr.mxu0 0.0
    %425 = vmatpush1.msra.mxu0 0.0
    %426 = vmatprep.subr.mxu0 0.0
    %427 = vmatpush1.msra.mxu0 0.0
    %428 = vmatprep.subr.mxu0 0.0
    %429 = vmatpush1.msra.mxu0 0.0
    %430 = vmatprep.mubr.f32.mxu0 0.0
    %431 = vmatmul.mubr.f32.gmra.mrb[0].mxu0 %v364
    %v432 = vpop.f32.mrb[0].mxu0
    %v433 = vadd.f32 %v361, %v432
    %v434 = vpop.f32.mrb[0].mxu0
    %435 = vdwg.mxu0
    %v436 = vmax.f32 %v433, 0.0
    %v437 = vld [vmem:[#allocation13] sm:$0xff]
    %v438 = vld [vmem:[#allocation13 + $0x8] sm:$0xff]
    %v439 = vld [vmem:[#allocation13 + $0x10] sm:$0xff]
    %v440 = vld [vmem:[#allocation13 + $0x18] sm:$0xff]
    %v441 = vld [vmem:[#allocation13 + $0x20] sm:$0xff]
    %v442 = vld [vmem:[#allocation13 + $0x28] sm:$0xff]
    %v443 = vld [vmem:[#allocation13 + $0x30] sm:$0xff]
    %v444 = vld [vmem:[#allocation13 + $0x38] sm:$0xff]
    %v445 = vld [vmem:[#allocation15] sm:$0x1]
    %v447 = vlaneseq
    %v448 = vshrl.u32 %v447, 7
    %v449 = vsub.s32 0, %v448
    %v450 = vrot.slane %v445, %v449
    %v453 = vsel %vm243, %v436, 0
    %455 = vmatprep.subr.mxu0 0.0
    %456 = vmatpush1.msra.mxu0 %v437
    %457 = vmatprep.subr.mxu0 0.0
    %458 = vmatpush1.msra.mxu0 %v438
    %459 = vmatprep.subr.mxu0 0.0
    %460 = vmatpush1.msra.mxu0 %v439
    %461 = vmatprep.subr.mxu0 0.0
    %462 = vmatpush1.msra.mxu0 %v440
    %463 = vmatprep.subr.mxu0 0.0
    %464 = vmatpush1.msra.mxu0 %v441
    %465 = vmatprep.subr.mxu0 0.0
    %466 = vmatpush1.msra.mxu0 %v442
    %467 = vmatprep.subr.mxu0 0.0
    %468 = vmatpush1.msra.mxu0 %v443
    %469 = vmatprep.subr.mxu0 0.0
    %470 = vmatpush1.msra.mxu0 %v444
    %471 = vmatprep.subr.mxu0 0.0
    %472 = vmatpush1.msra.mxu0 0.0
    %473 = vmatprep.subr.mxu0 0.0
    %474 = vmatpush1.msra.mxu0 0.0
    %475 = vmatprep.subr.mxu0 0.0
    %476 = vmatpush1.msra.mxu0 0.0
    %477 = vmatprep.subr.mxu0 0.0
    %478 = vmatpush1.msra.mxu0 0.0
    %479 = vmatprep.subr.mxu0 0.0
    %480 = vmatpush1.msra.mxu0 0.0
    %481 = vmatprep.subr.mxu0 0.0
    %482 = vmatpush1.msra.mxu0 0.0
    %483 = vmatprep.subr.mxu0 0.0
    %484 = vmatpush1.msra.mxu0 0.0
    %485 = vmatprep.subr.mxu0 0.0
    %486 = vmatpush1.msra.mxu0 0.0
    %487 = vmatprep.subr.mxu0 0.0
    %488 = vmatpush1.msra.mxu0 0.0
    %489 = vmatprep.subr.mxu0 0.0
    %490 = vmatpush1.msra.mxu0 0.0
    %491 = vmatprep.subr.mxu0 0.0
    %492 = vmatpush1.msra.mxu0 0.0
    %493 = vmatprep.subr.mxu0 0.0
    %494 = vmatpush1.msra.mxu0 0.0
    %495 = vmatprep.subr.mxu0 0.0
    %496 = vmatpush1.msra.mxu0 0.0
    %497 = vmatprep.subr.mxu0 0.0
    %498 = vmatpush1.msra.mxu0 0.0
    %499 = vmatprep.subr.mxu0 0.0
    %500 = vmatpush1.msra.mxu0 0.0
    %501 = vmatprep.subr.mxu0 0.0
    %502 = vmatpush1.msra.mxu0 0.0
    %503 = vmatprep.subr.mxu0 0.0
    %504 = vmatpush1.msra.mxu0 0.0
    %505 = vmatprep.subr.mxu0 0.0
    %506 = vmatpush1.msra.mxu0 0.0
    %507 = vmatprep.subr.mxu0 0.0
    %508 = vmatpush1.msra.mxu0 0.0
    %509 = vmatprep.subr.mxu0 0.0
    %510 = vmatpush1.msra.mxu0 0.0
    %511 = vmatprep.subr.mxu0 0.0
    %512 = vmatpush1.msra.mxu0 0.0
    %513 = vmatprep.subr.mxu0 0.0
    %514 = vmatpush1.msra.mxu0 0.0
    %515 = vmatprep.subr.mxu0 0.0
    %516 = vmatpush1.msra.mxu0 0.0
    %517 = vmatprep.subr.mxu0 0.0
    %518 = vmatpush1.msra.mxu0 0.0
    %519 = vmatprep.mubr.f32.mxu0 0.0
    %520 = vmatmul.mubr.f32.gmra.mrb[0].mxu0 %v453
    %v521 = vpop.f32.mrb[0].mxu0
    %v522 = vadd.f32 %v450, %v521
    %v523 = vpop.f32.mrb[0].mxu0
    %524 = vdwg.mxu0
    %525 = vst [vmem:[#allocation21] sm:$0xff] %v522
    %526 = vst [vmem:[#allocation2] sm:$0xff] %v196
    %527 = vst [vmem:[#allocation2 + $0x8] sm:$0xff] %v314
    %v528 = vld [vmem:[#allocation2] sm:$0xff]
    %v529 = vld [vmem:[#allocation2 + $0x8] sm:$0xff]
    %v530 = vld [vmem:[#allocation16] sm:$0xff]
    %v531 = vld [vmem:[#allocation16 + $0x8] sm:$0xff]
    %v532 = vld [vmem:[#allocation16 + $0x10] sm:$0xff]
    %v533 = vld [vmem:[#allocation16 + $0x18] sm:$0xff]
    %v534 = vld [vmem:[#allocation16 + $0x20] sm:$0xff]
    %v535 = vld [vmem:[#allocation16 + $0x28] sm:$0xff]
    %v536 = vld [vmem:[#allocation16 + $0x30] sm:$0xff]
    %v537 = vld [vmem:[#allocation16 + $0x38] sm:$0xff]
    %v538 = vld [vmem:[#allocation16 + $0x40] sm:$0xff]
    %v539 = vld [vmem:[#allocation16 + $0x48] sm:$0xff]
    %v540 = vld [vmem:[#allocation16 + $0x50] sm:$0xff]
    %v541 = vld [vmem:[#allocation16 + $0x58] sm:$0xff]
    %v542 = vld [vmem:[#allocation16 + $0x60] sm:$0xff]
    %v543 = vld [vmem:[#allocation16 + $0x68] sm:$0xff]
    %v544 = vld [vmem:[#allocation16 + $0x70] sm:$0xff]
    %v545 = vld [vmem:[#allocation16 + $0x78] sm:$0xff]
    %v546 = vld [vmem:[#allocation16 + $0x80] sm:$0xff]
    %v547 = vld [vmem:[#allocation16 + $0x88] sm:$0xff]
    %v548 = vld [vmem:[#allocation16 + $0x90] sm:$0xff]
    %v549 = vld [vmem:[#allocation16 + $0x98] sm:$0xff]
    %v550 = vld [vmem:[#allocation16 + $0xa0] sm:$0xff]
    %v551 = vld [vmem:[#allocation16 + $0xa8] sm:$0xff]
    %v552 = vld [vmem:[#allocation16 + $0xb0] sm:$0xff]
    %v553 = vld [vmem:[#allocation16 + $0xb8] sm:$0xff]
    %v554 = vld [vmem:[#allocation16 + $0xc0] sm:$0xff]
    %v555 = vld [vmem:[#allocation16 + $0xc8] sm:$0xff]
    %v556 = vld [vmem:[#allocation16 + $0xd0] sm:$0xff]
    %v557 = vld [vmem:[#allocation16 + $0xd8] sm:$0xff]
    %v558 = vld [vmem:[#allocation16 + $0xe0] sm:$0xff]
    %v559 = vld [vmem:[#allocation16 + $0xe8] sm:$0xff]
    %v560 = vld [vmem:[#allocation16 + $0xf0] sm:$0xff]
    %v561 = vld [vmem:[#allocation16 + $0xf8] sm:$0xff]
    %v562 = vld [vmem:[#allocation16 + $0x100] sm:$0xff]
    %v563 = vld [vmem:[#allocation16 + $0x108] sm:$0xff]
    %v564 = vld [vmem:[#allocation16 + $0x110] sm:$0xff]
    %v565 = vld [vmem:[#allocation16 + $0x118] sm:$0xff]
    %v566 = vld [vmem:[#allocation16 + $0x120] sm:$0xff]
    %v567 = vld [vmem:[#allocation16 + $0x128] sm:$0xff]
    %v568 = vld [vmem:[#allocation16 + $0x130] sm:$0xff]
    %v569 = vld [vmem:[#allocation16 + $0x138] sm:$0xff]
    %v570 = vld [vmem:[#allocation16 + $0x140] sm:$0xff]
    %v571 = vld [vmem:[#allocation16 + $0x148] sm:$0xff]
    %v572 = vld [vmem:[#allocation16 + $0x150] sm:$0xff]
    %v573 = vld [vmem:[#allocation16 + $0x158] sm:$0xff]
    %v574 = vld [vmem:[#allocation16 + $0x160] sm:$0xff]
    %v575 = vld [vmem:[#allocation16 + $0x168] sm:$0xff]
    %v576 = vld [vmem:[#allocation16 + $0x170] sm:$0xff]
    %v577 = vld [vmem:[#allocation16 + $0x178] sm:$0xff]
    %v578 = vld [vmem:[#allocation16 + $0x180] sm:$0xff]
    %v579 = vld [vmem:[#allocation16 + $0x188] sm:$0xff]
    %v580 = vld [vmem:[#allocation16 + $0x190] sm:$0xff]
    %v581 = vld [vmem:[#allocation16 + $0x198] sm:$0xff]
    %v582 = vld [vmem:[#allocation16 + $0x1a0] sm:$0xff]
    %v583 = vld [vmem:[#allocation16 + $0x1a8] sm:$0xff]
    %v584 = vld [vmem:[#allocation16 + $0x1b0] sm:$0xff]
    %v585 = vld [vmem:[#allocation16 + $0x1b8] sm:$0xff]
    %v586 = vld [vmem:[#allocation16 + $0x1c0] sm:$0xff]
    %v587 = vld [vmem:[#allocation16 + $0x1c8] sm:$0xff]
    %v588 = vld [vmem:[#allocation16 + $0x1d0] sm:$0xff]
    %v589 = vld [vmem:[#allocation16 + $0x1d8] sm:$0xff]
    %v590 = vld [vmem:[#allocation16 + $0x1e0] sm:$0xff]
    %v591 = vld [vmem:[#allocation16 + $0x1e8] sm:$0xff]
    %v592 = vld [vmem:[#allocation16 + $0x1f0] sm:$0xff]
    %v593 = vld [vmem:[#allocation16 + $0x1f8] sm:$0xff]
    %v594 = vld [vmem:[#allocation18] sm:$0x3]
    %v596 = vlaneseq
    %v597 = vshrl.u32 %v596, 7
    %v598 = vsub.s32 0, %v597
    %v599 = vrot.slane %v594, %v598
    %v600 = vlaneseq
    %v601 = vshrl.u32 %v600, 7
    %v602 = vsub.s32 1, %v601
    %v603 = vrot.slane %v594, %v602
    %606 = vmatprep.subr.mxu0 %v531
    %607 = vmatpush1.msra.mxu0 %v530
    %608 = vmatprep.subr.mxu0 %v533
    %609 = vmatpush1.msra.mxu0 %v532
    %610 = vmatprep.subr.mxu0 %v535
    %611 = vmatpush1.msra.mxu0 %v534
    %612 = vmatprep.subr.mxu0 %v537
    %613 = vmatpush1.msra.mxu0 %v536
    %614 = vmatprep.subr.mxu0 %v539
    %615 = vmatpush1.msra.mxu0 %v538
    %616 = vmatprep.subr.mxu0 %v541
    %617 = vmatpush1.msra.mxu0 %v540
    %618 = vmatprep.subr.mxu0 %v543
    %619 = vmatpush1.msra.mxu0 %v542
    %620 = vmatprep.subr.mxu0 %v545
    %621 = vmatpush1.msra.mxu0 %v544
    %622 = vmatprep.subr.mxu0 %v547
    %623 = vmatpush1.msra.mxu0 %v546
    %624 = vmatprep.subr.mxu0 %v549
    %625 = vmatpush1.msra.mxu0 %v548
    %626 = vmatprep.subr.mxu0 %v551
    %627 = vmatpush1.msra.mxu0 %v550
    %628 = vmatprep.subr.mxu0 %v553
    %629 = vmatpush1.msra.mxu0 %v552
    %630 = vmatprep.subr.mxu0 %v555
    %631 = vmatpush1.msra.mxu0 %v554
    %632 = vmatprep.subr.mxu0 %v557
    %633 = vmatpush1.msra.mxu0 %v556
    %634 = vmatprep.subr.mxu0 %v559
    %635 = vmatpush1.msra.mxu0 %v558
    %636 = vmatprep.subr.mxu0 %v561
    %637 = vmatpush1.msra.mxu0 %v560
    %638 = vmatprep.subr.mxu0 %v563
    %639 = vmatpush1.msra.mxu0 %v562
    %640 = vmatprep.subr.mxu0 %v565
    %641 = vmatpush1.msra.mxu0 %v564
    %642 = vmatprep.subr.mxu0 %v567
    %643 = vmatpush1.msra.mxu0 %v566
    %644 = vmatprep.subr.mxu0 %v569
    %645 = vmatpush1.msra.mxu0 %v568
    %646 = vmatprep.subr.mxu0 %v571
    %647 = vmatpush1.msra.mxu0 %v570
    %648 = vmatprep.subr.mxu0 %v573
    %649 = vmatpush1.msra.mxu0 %v572
    %650 = vmatprep.subr.mxu0 %v575
    %651 = vmatpush1.msra.mxu0 %v574
    %652 = vmatprep.subr.mxu0 %v577
    %653 = vmatpush1.msra.mxu0 %v576
    %654 = vmatprep.subr.mxu0 %v579
    %655 = vmatpush1.msra.mxu0 %v578
    %656 = vmatprep.subr.mxu0 %v581
    %657 = vmatpush1.msra.mxu0 %v580
    %658 = vmatprep.subr.mxu0 %v583
    %659 = vmatpush1.msra.mxu0 %v582
    %660 = vmatprep.subr.mxu0 %v585
    %661 = vmatpush1.msra.mxu0 %v584
    %662 = vmatprep.subr.mxu0 %v587
    %663 = vmatpush1.msra.mxu0 %v586
    %664 = vmatprep.subr.mxu0 %v589
    %665 = vmatpush1.msra.mxu0 %v588
    %666 = vmatprep.subr.mxu0 %v591
    %667 = vmatpush1.msra.mxu0 %v590
    %668 = vmatprep.subr.mxu0 %v593
    %669 = vmatpush1.msra.mxu0 %v592
    %670 = vmatprep.mubr.f32.mxu0 %v529
    %671 = vmatmul.mubr.f32.gmra.mrb[0].mxu0 %v528
    %v672 = vpop.f32.mrb[0].mxu0
    %v673 = vadd.f32 %v599, %v672
    %v674 = vpop.f32.mrb[0].mxu0
    %v675 = vadd.f32 %v603, %v674
    %676 = vdwg.mxu0
    %v677 = vmax.f32 %v673, 0.0
    %v678 = vmax.f32 %v675, 0.0
    %679 = vst [vmem:[#allocation3] sm:$0xff] %v677
    %680 = vst [vmem:[#allocation3 + $0x8] sm:$0xff] %v678
    %v681 = vld [vmem:[#allocation3] sm:$0xff]
    %v682 = vld [vmem:[#allocation3 + $0x8] sm:$0xff]
    %v683 = vld [vmem:[#allocation19] sm:$0xff]
    %v684 = vld [vmem:[#allocation19 + $0x8] sm:$0xff]
    %v685 = vld [vmem:[#allocation19 + $0x10] sm:$0xff]
    %v686 = vld [vmem:[#allocation19 + $0x18] sm:$0xff]
    %v687 = vld [vmem:[#allocation19 + $0x20] sm:$0xff]
    %v688 = vld [vmem:[#allocation19 + $0x28] sm:$0xff]
    %v689 = vld [vmem:[#allocation19 + $0x30] sm:$0xff]
    %v690 = vld [vmem:[#allocation19 + $0x38] sm:$0xff]
    %v691 = vld [vmem:[#allocation19 + $0x40] sm:$0xff]
    %v692 = vld [vmem:[#allocation19 + $0x48] sm:$0xff]
    %v693 = vld [vmem:[#allocation19 + $0x50] sm:$0xff]
    %v694 = vld [vmem:[#allocation19 + $0x58] sm:$0xff]
    %v695 = vld [vmem:[#allocation19 + $0x60] sm:$0xff]
    %v696 = vld [vmem:[#allocation19 + $0x68] sm:$0xff]
    %v697 = vld [vmem:[#allocation19 + $0x70] sm:$0xff]
    %v698 = vld [vmem:[#allocation19 + $0x78] sm:$0xff]
    %v699 = vld [vmem:[#allocation19 + $0x80] sm:$0xff]
    %v700 = vld [vmem:[#allocation19 + $0x88] sm:$0xff]
    %v701 = vld [vmem:[#allocation19 + $0x90] sm:$0xff]
    %v702 = vld [vmem:[#allocation19 + $0x98] sm:$0xff]
    %v703 = vld [vmem:[#allocation19 + $0xa0] sm:$0xff]
    %v704 = vld [vmem:[#allocation19 + $0xa8] sm:$0xff]
    %v705 = vld [vmem:[#allocation19 + $0xb0] sm:$0xff]
    %v706 = vld [vmem:[#allocation19 + $0xb8] sm:$0xff]
    %v707 = vld [vmem:[#allocation19 + $0xc0] sm:$0xff]
    %v708 = vld [vmem:[#allocation19 + $0xc8] sm:$0xff]
    %v709 = vld [vmem:[#allocation19 + $0xd0] sm:$0xff]
    %v710 = vld [vmem:[#allocation19 + $0xd8] sm:$0xff]
    %v711 = vld [vmem:[#allocation19 + $0xe0] sm:$0xff]
    %v712 = vld [vmem:[#allocation19 + $0xe8] sm:$0xff]
    %v713 = vld [vmem:[#allocation19 + $0xf0] sm:$0xff]
    %v714 = vld [vmem:[#allocation19 + $0xf8] sm:$0xff]
    %v715 = vld [vmem:[#allocation19 + $0x100] sm:$0xff]
    %v716 = vld [vmem:[#allocation19 + $0x108] sm:$0xff]
    %v717 = vld [vmem:[#allocation19 + $0x110] sm:$0xff]
    %v718 = vld [vmem:[#allocation19 + $0x118] sm:$0xff]
    %v719 = vld [vmem:[#allocation19 + $0x120] sm:$0xff]
    %v720 = vld [vmem:[#allocation19 + $0x128] sm:$0xff]
    %v721 = vld [vmem:[#allocation19 + $0x130] sm:$0xff]
    %v722 = vld [vmem:[#allocation19 + $0x138] sm:$0xff]
    %v723 = vld [vmem:[#allocation19 + $0x140] sm:$0xff]
    %v724 = vld [vmem:[#allocation19 + $0x148] sm:$0xff]
    %v725 = vld [vmem:[#allocation19 + $0x150] sm:$0xff]
    %v726 = vld [vmem:[#allocation19 + $0x158] sm:$0xff]
    %v727 = vld [vmem:[#allocation19 + $0x160] sm:$0xff]
    %v728 = vld [vmem:[#allocation19 + $0x168] sm:$0xff]
    %v729 = vld [vmem:[#allocation19 + $0x170] sm:$0xff]
    %v730 = vld [vmem:[#allocation19 + $0x178] sm:$0xff]
    %v731 = vld [vmem:[#allocation19 + $0x180] sm:$0xff]
    %v732 = vld [vmem:[#allocation19 + $0x188] sm:$0xff]
    %v733 = vld [vmem:[#allocation19 + $0x190] sm:$0xff]
    %v734 = vld [vmem:[#allocation19 + $0x198] sm:$0xff]
    %v735 = vld [vmem:[#allocation19 + $0x1a0] sm:$0xff]
    %v736 = vld [vmem:[#allocation19 + $0x1a8] sm:$0xff]
    %v737 = vld [vmem:[#allocation19 + $0x1b0] sm:$0xff]
    %v738 = vld [vmem:[#allocation19 + $0x1b8] sm:$0xff]
    %v739 = vld [vmem:[#allocation19 + $0x1c0] sm:$0xff]
    %v740 = vld [vmem:[#allocation19 + $0x1c8] sm:$0xff]
    %v741 = vld [vmem:[#allocation19 + $0x1d0] sm:$0xff]
    %v742 = vld [vmem:[#allocation19 + $0x1d8] sm:$0xff]
    %v743 = vld [vmem:[#allocation19 + $0x1e0] sm:$0xff]
    %v744 = vld [vmem:[#allocation19 + $0x1e8] sm:$0xff]
    %v745 = vld [vmem:[#allocation19 + $0x1f0] sm:$0xff]
    %v746 = vld [vmem:[#allocation19 + $0x1f8] sm:$0xff]
    %v747 = vld [vmem:[#allocation19 + $0x200] sm:$0xff]
    %v748 = vld [vmem:[#allocation19 + $0x208] sm:$0xff]
    %v749 = vld [vmem:[#allocation19 + $0x210] sm:$0xff]
    %v750 = vld [vmem:[#allocation19 + $0x218] sm:$0xff]
    %v751 = vld [vmem:[#allocation19 + $0x220] sm:$0xff]
    %v752 = vld [vmem:[#allocation19 + $0x228] sm:$0xff]
    %v753 = vld [vmem:[#allocation19 + $0x230] sm:$0xff]
    %v754 = vld [vmem:[#allocation19 + $0x238] sm:$0xff]
    %v755 = vld [vmem:[#allocation19 + $0x240] sm:$0xff]
    %v756 = vld [vmem:[#allocation19 + $0x248] sm:$0xff]
    %v757 = vld [vmem:[#allocation19 + $0x250] sm:$0xff]
    %v758 = vld [vmem:[#allocation19 + $0x258] sm:$0xff]
    %v759 = vld [vmem:[#allocation19 + $0x260] sm:$0xff]
    %v760 = vld [vmem:[#allocation19 + $0x268] sm:$0xff]
    %v761 = vld [vmem:[#allocation19 + $0x270] sm:$0xff]
    %v762 = vld [vmem:[#allocation19 + $0x278] sm:$0xff]
    %v763 = vld [vmem:[#allocation19 + $0x280] sm:$0xff]
    %v764 = vld [vmem:[#allocation19 + $0x288] sm:$0xff]
    %v765 = vld [vmem:[#allocation19 + $0x290] sm:$0xff]
    %v766 = vld [vmem:[#allocation19 + $0x298] sm:$0xff]
    %v767 = vld [vmem:[#allocation19 + $0x2a0] sm:$0xff]
    %v768 = vld [vmem:[#allocation19 + $0x2a8] sm:$0xff]
    %v769 = vld [vmem:[#allocation19 + $0x2b0] sm:$0xff]
    %v770 = vld [vmem:[#allocation19 + $0x2b8] sm:$0xff]
    %v771 = vld [vmem:[#allocation19 + $0x2c0] sm:$0xff]
    %v772 = vld [vmem:[#allocation19 + $0x2c8] sm:$0xff]
    %v773 = vld [vmem:[#allocation19 + $0x2d0] sm:$0xff]
    %v774 = vld [vmem:[#allocation19 + $0x2d8] sm:$0xff]
    %v775 = vld [vmem:[#allocation19 + $0x2e0] sm:$0xff]
    %v776 = vld [vmem:[#allocation19 + $0x2e8] sm:$0xff]
    %v777 = vld [vmem:[#allocation19 + $0x2f0] sm:$0xff]
    %v778 = vld [vmem:[#allocation19 + $0x2f8] sm:$0xff]
    %v779 = vld [vmem:[#allocation19 + $0x300] sm:$0xff]
    %v780 = vld [vmem:[#allocation19 + $0x308] sm:$0xff]
    %v781 = vld [vmem:[#allocation19 + $0x310] sm:$0xff]
    %v782 = vld [vmem:[#allocation19 + $0x318] sm:$0xff]
    %v783 = vld [vmem:[#allocation19 + $0x320] sm:$0xff]
    %v784 = vld [vmem:[#allocation19 + $0x328] sm:$0xff]
    %v785 = vld [vmem:[#allocation19 + $0x330] sm:$0xff]
    %v786 = vld [vmem:[#allocation19 + $0x338] sm:$0xff]
    %v787 = vld [vmem:[#allocation19 + $0x340] sm:$0xff]
    %v788 = vld [vmem:[#allocation19 + $0x348] sm:$0xff]
    %v789 = vld [vmem:[#allocation19 + $0x350] sm:$0xff]
    %v790 = vld [vmem:[#allocation19 + $0x358] sm:$0xff]
    %v791 = vld [vmem:[#allocation19 + $0x360] sm:$0xff]
    %v792 = vld [vmem:[#allocation19 + $0x368] sm:$0xff]
    %v793 = vld [vmem:[#allocation19 + $0x370] sm:$0xff]
    %v794 = vld [vmem:[#allocation19 + $0x378] sm:$0xff]
    %v795 = vld [vmem:[#allocation19 + $0x380] sm:$0xff]
    %v796 = vld [vmem:[#allocation19 + $0x388] sm:$0xff]
    %v797 = vld [vmem:[#allocation19 + $0x390] sm:$0xff]
    %v798 = vld [vmem:[#allocation19 + $0x398] sm:$0xff]
    %v799 = vld [vmem:[#allocation19 + $0x3a0] sm:$0xff]
    %v800 = vld [vmem:[#allocation19 + $0x3a8] sm:$0xff]
    %v801 = vld [vmem:[#allocation19 + $0x3b0] sm:$0xff]
    %v802 = vld [vmem:[#allocation19 + $0x3b8] sm:$0xff]
    %v803 = vld [vmem:[#allocation19 + $0x3c0] sm:$0xff]
    %v804 = vld [vmem:[#allocation19 + $0x3c8] sm:$0xff]
    %v805 = vld [vmem:[#allocation19 + $0x3d0] sm:$0xff]
    %v806 = vld [vmem:[#allocation19 + $0x3d8] sm:$0xff]
    %v807 = vld [vmem:[#allocation19 + $0x3e0] sm:$0xff]
    %v808 = vld [vmem:[#allocation19 + $0x3e8] sm:$0xff]
    %v809 = vld [vmem:[#allocation19 + $0x3f0] sm:$0xff]
    %v810 = vld [vmem:[#allocation19 + $0x3f8] sm:$0xff]
    %v811 = vld [vmem:[%s16] sm:$0xf]
    %v813 = vlaneseq
    %v814 = vshrl.u32 %v813, 7
    %v815 = vsub.s32 0, %v814
    %v816 = vrot.slane %v811, %v815
    %v817 = vlaneseq
    %v818 = vshrl.u32 %v817, 7
    %v819 = vsub.s32 1, %v818
    %v820 = vrot.slane %v811, %v819
    %v821 = vlaneseq
    %v822 = vshrl.u32 %v821, 7
    %v823 = vsub.s32 2, %v822
    %v824 = vrot.slane %v811, %v823
    %v825 = vlaneseq
    %v826 = vshrl.u32 %v825, 7
    %v827 = vsub.s32 3, %v826
    %v828 = vrot.slane %v811, %v827
    %833 = vmatprep.subr.mxu0 %v684
    %834 = vmatpush1.msra.mxu0 %v683
    %835 = vmatprep.subr.mxu0 %v688
    %836 = vmatpush1.msra.mxu0 %v687
    %837 = vmatprep.subr.mxu0 %v692
    %838 = vmatpush1.msra.mxu0 %v691
    %839 = vmatprep.subr.mxu0 %v696
    %840 = vmatpush1.msra.mxu0 %v695
    %841 = vmatprep.subr.mxu0 %v700
    %842 = vmatpush1.msra.mxu0 %v699
    %843 = vmatprep.subr.mxu0 %v704
    %844 = vmatpush1.msra.mxu0 %v703
    %845 = vmatprep.subr.mxu0 %v708
    %846 = vmatpush1.msra.mxu0 %v707
    %847 = vmatprep.subr.mxu0 %v712
    %848 = vmatpush1.msra.mxu0 %v711
    %849 = vmatprep.subr.mxu0 %v716
    %850 = vmatpush1.msra.mxu0 %v715
    %851 = vmatprep.subr.mxu0 %v720
    %852 = vmatpush1.msra.mxu0 %v719
    %853 = vmatprep.subr.mxu0 %v724
    %854 = vmatpush1.msra.mxu0 %v723
    %855 = vmatprep.subr.mxu0 %v728
    %856 = vmatpush1.msra.mxu0 %v727
    %857 = vmatprep.subr.mxu0 %v732
    %858 = vmatpush1.msra.mxu0 %v731
    %859 = vmatprep.subr.mxu0 %v736
    %860 = vmatpush1.msra.mxu0 %v735
    %861 = vmatprep.subr.mxu0 %v740
    %862 = vmatpush1.msra.mxu0 %v739
    %863 = vmatprep.subr.mxu0 %v744
    %864 = vmatpush1.msra.mxu0 %v743
    %865 = vmatprep.subr.mxu0 %v748
    %866 = vmatpush1.msra.mxu0 %v747
    %867 = vmatprep.subr.mxu0 %v752
    %868 = vmatpush1.msra.mxu0 %v751
    %869 = vmatprep.subr.mxu0 %v756
    %870 = vmatpush1.msra.mxu0 %v755
    %871 = vmatprep.subr.mxu0 %v760
    %872 = vmatpush1.msra.mxu0 %v759
    %873 = vmatprep.subr.mxu0 %v764
    %874 = vmatpush1.msra.mxu0 %v763
    %875 = vmatprep.subr.mxu0 %v768
    %876 = vmatpush1.msra.mxu0 %v767
    %877 = vmatprep.subr.mxu0 %v772
    %878 = vmatpush1.msra.mxu0 %v771
    %879 = vmatprep.subr.mxu0 %v776
    %880 = vmatpush1.msra.mxu0 %v775
    %881 = vmatprep.subr.mxu0 %v780
    %882 = vmatpush1.msra.mxu0 %v779
    %883 = vmatprep.subr.mxu0 %v784
    %884 = vmatpush1.msra.mxu0 %v783
    %885 = vmatprep.subr.mxu0 %v788
    %886 = vmatpush1.msra.mxu0 %v787
    %887 = vmatprep.subr.mxu0 %v792
    %888 = vmatpush1.msra.mxu0 %v791
    %889 = vmatprep.subr.mxu0 %v796
    %890 = vmatpush1.msra.mxu0 %v795
    %891 = vmatprep.subr.mxu0 %v800
    %892 = vmatpush1.msra.mxu0 %v799
    %893 = vmatprep.subr.mxu0 %v804
    %894 = vmatpush1.msra.mxu0 %v803
    %895 = vmatprep.subr.mxu0 %v808
    %896 = vmatpush1.msra.mxu0 %v807
    %897 = vmatprep.mubr.f32.mxu0 %v682
    %898 = vmatmul.mubr.f32.gmra.mrb[0].mxu0 %v681
    %v899 = vpop.f32.mrb[0].mxu0
    %v900 = vadd.f32 %v816, %v899
    %v901 = vpop.f32.mrb[0].mxu0
    %v902 = vadd.f32 %v820, %v901
    %903 = vdwg.mxu0
    %904 = vmatprep.subr.mxu0 %v686
    %905 = vmatpush1.msra.mxu0 %v685
    %906 = vmatprep.subr.mxu0 %v690
    %907 = vmatpush1.msra.mxu0 %v689
    %908 = vmatprep.subr.mxu0 %v694
    %909 = vmatpush1.msra.mxu0 %v693
    %910 = vmatprep.subr.mxu0 %v698
    %911 = vmatpush1.msra.mxu0 %v697
    %912 = vmatprep.subr.mxu0 %v702
    %913 = vmatpush1.msra.mxu0 %v701
    %914 = vmatprep.subr.mxu0 %v706
    %915 = vmatpush1.msra.mxu0 %v705
    %916 = vmatprep.subr.mxu0 %v710
    %917 = vmatpush1.msra.mxu0 %v709
    %918 = vmatprep.subr.mxu0 %v714
    %919 = vmatpush1.msra.mxu0 %v713
    %920 = vmatprep.subr.mxu0 %v718
    %921 = vmatpush1.msra.mxu0 %v717
    %922 = vmatprep.subr.mxu0 %v722
    %923 = vmatpush1.msra.mxu0 %v721
    %924 = vmatprep.subr.mxu0 %v726
    %925 = vmatpush1.msra.mxu0 %v725
    %926 = vmatprep.subr.mxu0 %v730
    %927 = vmatpush1.msra.mxu0 %v729
    %928 = vmatprep.subr.mxu0 %v734
    %929 = vmatpush1.msra.mxu0 %v733
    %930 = vmatprep.subr.mxu0 %v738
    %931 = vmatpush1.msra.mxu0 %v737
    %932 = vmatprep.subr.mxu0 %v742
    %933 = vmatpush1.msra.mxu0 %v741
    %934 = vmatprep.subr.mxu0 %v746
    %935 = vmatpush1.msra.mxu0 %v745
    %936 = vmatprep.subr.mxu0 %v750
    %937 = vmatpush1.msra.mxu0 %v749
    %938 = vmatprep.subr.mxu0 %v754
    %939 = vmatpush1.msra.mxu0 %v753
    %940 = vmatprep.subr.mxu0 %v758
    %941 = vmatpush1.msra.mxu0 %v757
    %942 = vmatprep.subr.mxu0 %v762
    %943 = vmatpush1.msra.mxu0 %v761
    %944 = vmatprep.subr.mxu0 %v766
    %945 = vmatpush1.msra.mxu0 %v765
    %946 = vmatprep.subr.mxu0 %v770
    %947 = vmatpush1.msra.mxu0 %v769
    %948 = vmatprep.subr.mxu0 %v774
    %949 = vmatpush1.msra.mxu0 %v773
    %950 = vmatprep.subr.mxu0 %v778
    %951 = vmatpush1.msra.mxu0 %v777
    %952 = vmatprep.subr.mxu0 %v782
    %953 = vmatpush1.msra.mxu0 %v781
    %954 = vmatprep.subr.mxu0 %v786
    %955 = vmatpush1.msra.mxu0 %v785
    %956 = vmatprep.subr.mxu0 %v790
    %957 = vmatpush1.msra.mxu0 %v789
    %958 = vmatprep.subr.mxu0 %v794
    %959 = vmatpush1.msra.mxu0 %v793
    %960 = vmatprep.subr.mxu0 %v798
    %961 = vmatpush1.msra.mxu0 %v797
    %962 = vmatprep.subr.mxu0 %v802
    %963 = vmatpush1.msra.mxu0 %v801
    %964 = vmatprep.subr.mxu0 %v806
    %965 = vmatpush1.msra.mxu0 %v805
    %966 = vmatprep.subr.mxu0 %v810
    %967 = vmatpush1.msra.mxu0 %v809
    %968 = vmatprep.mubr.f32.mxu0 %v682
    %969 = vmatmul.mubr.f32.gmra.mrb[0].mxu0 %v681
    %v970 = vpop.f32.mrb[0].mxu0
    %v971 = vadd.f32 %v824, %v970
    %v972 = vpop.f32.mrb[0].mxu0
    %v973 = vadd.f32 %v828, %v972
    %974 = vdwg.mxu0
    %975 = vst [vmem:[%s18] sm:$0xff] %v900
    %976 = vst [vmem:[%s18 + $0x8] sm:$0xff] %v902
    %977 = vst [vmem:[%s18 + $0x10] sm:$0xff] %v971
    %978 = vst [vmem:[%s18 + $0x18] sm:$0xff] %v973
    %v979 = vld [vmem:[%s18] sm:$0xff]
    %v980 = vld [vmem:[#allocation21] sm:$0xff]
    %v981 = vmul.f32 %v979, %v980
    %982 = vadd.xlane.f32.xlu0 %v981
    %v983 = vpop.xlane.xlu0 %982
    %vm984 = vcmask 7168
    %985 = vst.msk [vmem:[%s17] sm:$0xff] %vm984, %v983
    %v986 = vld [vmem:[%s18 + $0x8] sm:$0xff]
    %v987 = vld [vmem:[#allocation21] sm:$0xff]
    %v988 = vmul.f32 %v986, %v987
    %989 = vadd.xlane.f32.xlu0 %v988
    %v990 = vpop.xlane.xlu0 %989
    %vm991 = vcmask 15368
    %992 = vst.msk [vmem:[%s17] sm:$0xff] %vm991, %v990
    %v993 = vld [vmem:[%s18 + $0x10] sm:$0xff]
    %v994 = vld [vmem:[#allocation21] sm:$0xff]
    %v995 = vmul.f32 %v993, %v994
    %996 = vadd.xlane.f32.xlu0 %v995
    %v997 = vpop.xlane.xlu0 %996
    %vm998 = vcmask 23568
    %999 = vst.msk [vmem:[%s17] sm:$0xff] %vm998, %v997
    %v1000 = vld [vmem:[%s18 + $0x18] sm:$0xff]
    %v1001 = vld [vmem:[#allocation21] sm:$0xff]
    %v1002 = vmul.f32 %v1000, %v1001
    %1003 = vadd.xlane.f32.xlu0 %v1002
    %v1004 = vpop.xlane.xlu0 %1003
    %vm1005 = vcmask 31768
    %1006 = vst.msk [vmem:[%s17] sm:$0xff] %vm1005, %v1004
    // Predicated region
    $region110: #{state_goal_usf_forward.1} parent=1 // pred_check
      _
    $region111: #{state_goal_usf_forward.1} parent=1 // pred_check_branch
      %1008 = sbr.rel (0) target = $region113
    $region112: #{state_goal_usf_forward.1} parent=1 // pred_region
      _
    $region113: #{state_goal_usf_forward.1} parent=1 // pred_fallthru
      _
    // Predicated region
    $region114: #{state_goal_usf_forward.1} parent=1 // pred_check
      _
    $region115: #{state_goal_usf_forward.1} parent=1 // pred_check_branch
      %1010 = sbr.rel (0) target = $region117
    $region116: #{state_goal_usf_forward.1} parent=1 // pred_region
      _
    $region117: #{state_goal_usf_forward.1} parent=1 // pred_fallthru
      _
    // Predicated region
    $region118: #{state_goal_usf_forward.1} parent=1 // pred_check
      _
    $region119: #{state_goal_usf_forward.1} parent=1 // pred_check_branch
      %1012 = sbr.rel (0) target = $region121
    $region120: #{state_goal_usf_forward.1} parent=1 // pred_region
      %s1014 = ssub.s32 128, 128
      %1015 = vsyncadd [#allocation6], %s1014
      %s1017 = sshll.u32 [#allocation21], 4
      %s1018 = int_to_ptr.vmem [resolvable:$true] %s1017
      %1020 = dma.vmem_to_hbm [thread:$0]  %s1018, 128, %s19, [#allocation6]
    $region121: #{state_goal_usf_forward.1} parent=1 // pred_fallthru
      _
    // Predicated region
    $region122: #{state_goal_usf_forward.1} parent=1 // pred_check
      _
    $region123: #{state_goal_usf_forward.1} parent=1 // pred_check_branch
      %1022 = sbr.rel (0) target = $region125
    $region124: #{state_goal_usf_forward.1} parent=1 // pred_region
      _
    $region125: #{state_goal_usf_forward.1} parent=1 // pred_fallthru
      _
    // Predicated region
    $region126: #{state_goal_usf_forward.1} parent=1 // pred_check
      _
    $region127: #{state_goal_usf_forward.1} parent=1 // pred_check_branch
      %1024 = sbr.rel (0) target = $region129
    $region128: #{state_goal_usf_forward.1} parent=1 // pred_region
      _
    $region129: #{state_goal_usf_forward.1} parent=1 // pred_fallthru
      _
    // Predicated region
    $region130: #{state_goal_usf_forward.1} parent=1 // pred_check
      _
    $region131: #{state_goal_usf_forward.1} parent=1 // pred_check_branch
      %1026 = sbr.rel (0) target = $region133
    $region132: #{state_goal_usf_forward.1} parent=1 // pred_region
      %1027 = dma.done [#allocation6], 128
    $region133: #{state_goal_usf_forward.1} parent=1 // pred_fallthru
      _
    %1028 = vsyncpa [#allocation5], 1
    %1029 = vsyncpa [#allocation8], 1
    %1030 = vsyncpa [#allocation11], 1
    %1031 = vsyncpa [#allocation14], 1
    %1032 = vsyncpa [#allocation17], 1
    %1033 = vsyncpa [#allocation20], 1
    %1034 = vsyncpa [#allocation6], 1

</llo_original>
